<compile_context>
chip_gen: v6e
topology: v6e:2x2x1
jax: 0.10.0
libtpu: 0.0.40
codegen_flags: <defaults>
</compile_context>

<pallas_src>
import math
import functools

import numpy as np
import jax
import jax.numpy as jnp
from jax import lax
from jax.experimental import pallas as pl
from jax.experimental.pallas import tpu as pltpu

LRELU_SLOPE = 0.2
DEMOD_EPS = 1e-5
ACTVN_GAIN = math.sqrt(2.0)


def _make_tap_masks(H, W):
    """(9, 1, H*W) {0,1} masks: tap t = kh*3+kw is valid where the neighbour
    (h+kh-1, w+kw-1) lies inside the image (zero padding).

    NOTE: with pltpu.roll-based tap shifts every lane that wraps around the
    flattened image is one of the positions zeroed here -- exactly true for
    kernel_size=3 / pad=1; revisit if kernel size or padding changes."""
    hw = H * W
    hh = np.arange(hw) // W
    ww = np.arange(hw) % W
    masks = np.empty((9, 1, hw), np.float32)
    for kh in range(3):
        for kw in range(3):
            dh, dw = kh - 1, kw - 1
            m = np.ones(hw, dtype=bool)
            if dh == -1:
                m &= hh >= 1
            if dh == 1:
                m &= hh <= H - 2
            if dw == -1:
                m &= ww >= 1
            if dw == 1:
                m &= ww <= W - 2
            masks[kh * 3 + kw, 0, :] = m
    return jnp.asarray(masks)


def _fused_styled_block_kernel(x_ref, lat_ref, mlpT_ref, mlpC_ref, masks_ref,
                               w_ref, aux_ref, o_ref, *, H, W, cin, cout, gain):
    f32 = jnp.float32
    HW = H * W
    ctot = cin + cout

    x = x_ref[0].astype(f32)           # (cin, HW)  channels-first, flat spatial
    lat = lat_ref[0].astype(f32)       # (1, Ld+1)  latent augmented with a 1
    mlpT = mlpT_ref[...].astype(f32)   # (Ld+1, ctot)
    mlpC = mlpC_ref[...].astype(f32)   # (ctot, Ld+1)
    aux = aux_ref[...].astype(f32)     # (cout, ctot+2) = [wsq0 | wsq1 | b0 | b1]
    masks = masks_ref[...]             # (9, 1, HW) f32 {0,1}, precomputed
    w_all = w_ref[...]                 # (9, cout, ctot)  MXU dtype (bf16/f32)

    # --- per-sample style (EqualLinear incl. bias via the augmented column) --
    # Computed once per grid step == once per sample (grid is (B,)).  The row
    # form feeds the demod lane-reductions; the column form modulates the
    # activations.  Both are O(ctot*Ld) and avoid any in-kernel transpose.
    s_row = jnp.dot(lat, mlpT, preferred_element_type=f32)     # (1, ctot)
    s_col = jnp.sum(mlpC * lat, axis=1, keepdims=True)         # (ctot, 1)
    s0_row, s1_row = s_row[:, :cin], s_row[:, cin:]
    s0_col, s1_col = s_col[:cin, :], s_col[cin:, :]

    wsq0 = aux[:, :cin]                 # (cout, cin)   demod tables stay f32
    wsq1 = aux[:, cin:ctot]             # (cout, cout)
    b0 = aux[:, ctot:ctot + 1]          # (cout, 1)
    b1 = aux[:, ctot + 1:ctot + 2]      # (cout, 1)

    # demod: d[co] = rsqrt(sum_ci s[ci]^2 * sum_k w[co,ci,k]^2 + eps)   (f32)
    d0 = lax.rsqrt(jnp.sum(wsq0 * (s0_row * s0_row), axis=1, keepdims=True)
                   + DEMOD_EPS)                                 # (cout, 1)
    d1 = lax.rsqrt(jnp.sum(wsq1 * (s1_row * s1_row), axis=1, keepdims=True)
                   + DEMOD_EPS)                                 # (cout, 1)

    deltas = tuple((kh - 1) * W + (kw - 1) for kh in range(3) for kw in range(3))

    def mod_conv_lrelu(a, s_c, d_col, b_col, lo, hi):
        # Modulate the *activation* (per-Cin scale); the resident conv weight
        # stays a batch-invariant constant.  Demod folds into the per-Cout
        # output scale.  Tap accumulation: no (9C, HW) im2col slab.
        a_mod = a * s_c                                          # (C, HW) f32
        acc = None
        for t, delta in enumerate(deltas):
            if delta == 0:
                shifted = a_mod                 # centre tap: no shift, mask==1
            else:
                # pltpu.roll runs on the XLU; every wrapped lane is zeroed by
                # the boundary mask, so the zero padding is implicit.
                shifted = pltpu.roll(a_mod, shift=(-delta) % HW, axis=1)
                shifted = shifted * masks[t]
            w_tap = w_all[t][:, lo:hi]                           # (cout, C)
            part = jnp.dot(w_tap, shifted.astype(w_all.dtype),
                           preferred_element_type=f32)           # (cout, HW)
            acc = part if acc is None else acc + part
        y = acc * d_col + b_col
        # LeakyReLU(0.2) fused with the sqrt(2) activation gain (f32).
        return jnp.where(y >= 0.0, y, LRELU_SLOPE * y) * gain

    h = mod_conv_lrelu(x, s0_col, d0, b0, 0, cin)       # conv0 + lrelu*sqrt(2)
    y = mod_conv_lrelu(h, s1_col, d1, b1, cin, ctot)    # conv1 + lrelu*sqrt(2)
    o_ref[0] = y.astype(o_ref.dtype)


def prepare_params(params, mxu_dtype=jnp.bfloat16):
    """One-time weight preprocessing (hoisted out of the forward pass).

    mxu_dtype: storage/operand dtype of the conv tap weights fed to the MXU
    (bf16 recommended on v6e/v7x); accumulation and demod math stay f32."""
    w0, w1 = params["w0"], params["w1"]
    cout, cin = w0.shape[0], w0.shape[1]
    ld = params["mlp0_w"].shape[1]

    def conv_prep(w):
        co, ci = w.shape[0], w.shape[1]
        w_eff = (w * math.sqrt(2.0 / (ci * 9))).astype(jnp.float32)  # EqualLR
        # (co, ci, 3, 3) -> per-tap matrices (9, co, ci), tap index kh*3+kw
        w_taps = jnp.transpose(w_eff, (2, 3, 0, 1)).reshape(9, co, ci)
        w_sq = jnp.sum(w_eff * w_eff, axis=(2, 3))                   # (co, ci)
        return w_taps, w_sq

    w0_taps, w0_sq = conv_prep(w0)
    w1_taps, w1_sq = conv_prep(w1)
    # Both layers' tap weights packed into one resident, batch-invariant array.
    w_taps = jnp.concatenate([w0_taps, w1_taps], axis=2).astype(mxu_dtype)

    # Style MLPs (EqualLinear): EqualLR scale on the weight only; the bias is
    # appended as an extra column so nonzero (checkpoint-loaded) biases are
    # handled exactly (the latent gets an extra constant-1 feature).
    mlp_scale = math.sqrt(2.0 / ld)
    mlp0 = jnp.concatenate([params["mlp0_w"] * mlp_scale,
                            params["mlp0_b"].reshape(cin, 1)], axis=1)
    mlp1 = jnp.concatenate([params["mlp1_w"] * mlp_scale,
                            params["mlp1_b"].reshape(cout, 1)], axis=1)
    mlpC = jnp.concatenate([mlp0, mlp1], axis=0).astype(jnp.float32)  # (ctot,Ld+1)
    mlpT = mlpC.T                                                     # (Ld+1,ctot)

    # Pack the remaining tiny per-layer constants into one (cout, ctot+2) slab.
    aux = jnp.concatenate(
        [w0_sq, w1_sq,
         params["b0"].reshape(cout, 1).astype(jnp.float32),
         params["b1"].reshape(cout, 1).astype(jnp.float32)], axis=1)

    return {"mlpT": mlpT, "mlpC": mlpC, "w_taps": w_taps, "aux": aux}


def styled_conv_block(x_nchw, latent, prep):
    """StyledConvBlock forward (modulated_conv=True, lrelu, zero padding)."""
    B, cin, H, W = x_nchw.shape
    HW = H * W
    cout = prep["aux"].shape[0]
    ctot = prep["w_taps"].shape[2]
    assert ctot == cin + cout and prep["mlpT"].shape[1] == ctot
    ld1 = prep["mlpT"].shape[0]
    assert latent.shape == (B, ld1 - 1)

    x_flat = x_nchw.reshape(B, cin, HW)          # free reshape NCHW -> (C, HW)
    lat_aug = jnp.concatenate(
        [latent, jnp.ones((B, 1), latent.dtype)], axis=1).reshape(B, 1, ld1)
    masks = _make_tap_masks(H, W)                # constant; folded under jit

    kernel = functools.partial(_fused_styled_block_kernel,
                               H=H, W=W, cin=cin, cout=cout, gain=ACTVN_GAIN)
    # NOTE: at real StyleGAN resolutions the (C, HW) blocks should additionally
    # be tiled over HW (multiples of 128 lanes, 1-row halo handled by the
    # roll/mask) and batch folded into the lane axis -- the tap-accumulation
    # structure keeps live VMEM at ~1x the activation tile, so that retiling
    # does not change the kernel body.  At this test size one full image per
    # grid step is already VMEM-tiny and lane-dense (HW = 256 lanes).
    out = pl.pallas_call(
        kernel,
        out_shape=jax.ShapeDtypeStruct((B, cout, HW), x_nchw.dtype),
        grid_spec=pltpu.PrefetchScalarGridSpec(
            num_scalar_prefetch=0,
            grid=(B,),
            in_specs=[
                pl.BlockSpec((1, cin, HW), lambda b: (b, 0, 0)),
                pl.BlockSpec((1, 1, ld1), lambda b: (b, 0, 0)),
                pl.BlockSpec((ld1, ctot), lambda b: (0, 0)),
                pl.BlockSpec((ctot, ld1), lambda b: (0, 0)),
                pl.BlockSpec((9, 1, HW), lambda b: (0, 0, 0)),
                pl.BlockSpec((9, cout, ctot), lambda b: (0, 0, 0)),
                pl.BlockSpec((cout, ctot + 2), lambda b: (0, 0)),
            ],
            out_specs=pl.BlockSpec((1, cout, HW), lambda b: (b, 0, 0)),
        ),
        compiler_params=pltpu.CompilerParams(
            dimension_semantics=("parallel",),    # megacore / v7x 2-TC split
            vmem_limit_bytes=32 * 1024 * 1024),
    )(x_flat, lat_aug, prep["mlpT"], prep["mlpC"], masks,
      prep["w_taps"], prep["aux"])
    return out.reshape(B, cout, H, W)            # free reshape back to NCHW


# ----------------------------- pure-JAX reference ---------------------------

def _ref_modconv_lrelu(x_nchw, latent, w_conv, w_mlp, b_mlp, b_conv,
                       gain=ACTVN_GAIN):
    B, Cin, H, W = x_nchw.shape
    Cout = w_conv.shape[0]
    Ld = w_mlp.shape[1]
    s = latent @ (w_mlp * math.sqrt(2.0 / Ld)).T + b_mlp[None, :]    # (B, Cin)
    w = w_conv * math.sqrt(2.0 / (Cin * 9))                          # EqualLR
    w_mod = s[:, None, :, None, None] * w[None]                      # (B,Co,Ci,3,3)
    d = lax.rsqrt(jnp.sum(w_mod ** 2, axis=(2, 3, 4), keepdims=True)
                  + DEMOD_EPS)
    w_fin = w_mod * d
    x_pad = jnp.pad(x_nchw, ((0, 0), (0, 0), (1, 1), (1, 1)))
    outs = []
    for b in range(B):
        o = lax.conv_general_dilated(
            x_pad[b:b + 1], w_fin[b], (1, 1), "VALID",
            dimension_numbers=("NCHW", "OIHW", "NCHW"))
        outs.append(o)
    out = jnp.concatenate(outs, 0) + b_conv.reshape(1, Cout, 1, 1)
    return jnp.where(out >= 0, out, LRELU_SLOPE * out) * gain


def _ref_block(x_nchw, latent, params):
    out = _ref_modconv_lrelu(x_nchw, latent, params["w0"],
                             params["mlp0_w"], params["mlp0_b"], params["b0"])
    out = _ref_modconv_lrelu(out, latent, params["w1"],
                             params["mlp1_w"], params["mlp1_b"], params["b1"])
    return out


# ---------------------------------- main -------------------------------------

if __name__ == "__main__":
    B, FIN, FOUT = 2, 4, 8
    H = W = 16
    LATENT_DIM = 32

    key = jax.random.PRNGKey(0)
    ks = jax.random.split(key, 10)
    x = jax.random.normal(ks[0], (B, FIN, H, W), dtype=jnp.float32)
    latent = jax.random.normal(ks[1], (B, LATENT_DIM), dtype=jnp.float32)

    # The module zero-initialises all biases; small nonzero values are used
    # here so the (checkpoint-relevant) bias paths flagged in review are
    # actually exercised.
    params = {
        "w0": jax.random.normal(ks[2], (FOUT, FIN, 3, 3), dtype=jnp.float32),
        "b0": 0.1 * jax.random.normal(ks[3], (1, FOUT, 1, 1), dtype=jnp.float32),
        "mlp0_w": jax.random.normal(ks[4], (FIN, LATENT_DIM), dtype=jnp.float32),
        "mlp0_b": 0.1 * jax.random.normal(ks[5], (FIN,), dtype=jnp.float32),
        "w1": jax.random.normal(ks[6], (FOUT, FOUT, 3, 3), dtype=jnp.float32),
        "b1": 0.1 * jax.random.normal(ks[7], (1, FOUT, 1, 1), dtype=jnp.float32),
        "mlp1_w": jax.random.normal(ks[8], (FOUT, LATENT_DIM), dtype=jnp.float32),
        "mlp1_b": 0.1 * jax.random.normal(ks[9], (FOUT,), dtype=jnp.float32),
    }

    fwd = jax.jit(styled_conv_block)
    ref = jax.block_until_ready(_ref_block(x, latent, params))

    # f32 MXU operands: tight check of the restructured math (activation
    # modulation + post-conv demod + roll/mask tap accumulation).
    prep_f32 = prepare_params(params, mxu_dtype=jnp.float32)
    out_f32 = jax.block_until_ready(fwd(x, latent, prep_f32))
    np.testing.assert_allclose(np.asarray(out_f32), np.asarray(ref),
                               rtol=1e-3, atol=1e-4)

    # bf16 MXU operands (perf default for v6e/v7x).  Accumulation, demod and
    # lrelu stay f32, so the only error is bf16 operand rounding through two
    # 3x3 convs -> loose tolerance.
    prep_bf16 = prepare_params(params, mxu_dtype=jnp.bfloat16)
    out_bf16 = jax.block_until_ready(fwd(x, latent, prep_bf16))
    np.testing.assert_allclose(np.asarray(out_bf16), np.asarray(ref),
                               rtol=5e-2, atol=5e-2)

    assert out_f32.shape == (B, FOUT, H, W)
    print("KERNEL_OK")
</pallas_src>

<mosaic_0001>
module attributes {stable_mosaic.version = 11 : i64} {
  func.func @_fused_styled_block_kernel(%arg0: i32, %arg1: memref<1x4x256xf32, #tpu.memory_space<vmem>>, %arg2: memref<1x1x33xf32, #tpu.memory_space<vmem>>, %arg3: memref<33x12xf32, #tpu.memory_space<vmem>>, %arg4: memref<12x33xf32, #tpu.memory_space<vmem>>, %arg5: memref<9x1x256xf32, #tpu.memory_space<vmem>>, %arg6: memref<9x8x12xf32, #tpu.memory_space<vmem>>, %arg7: memref<8x14xf32, #tpu.memory_space<vmem>>, %arg8: memref<1x8x256xf32, #tpu.memory_space<vmem>>) attributes {dimension_semantics = [#tpu.dimension_semantics<parallel>], iteration_bounds = array<i64: 2>, scalar_prefetch = 0 : i64, scratch_operands = 0 : i64, tpu.core_type = #tpu.core_type<tc>, window_params = [{transform_indices = @transform_0, window_bounds = array<i64: 1, 4, 256>}, {transform_indices = @transform_1, window_bounds = array<i64: 1, 1, 33>}, {pipeline_mode = #tpu.pipeline_mode<synchronous>, transform_indices = @transform_2, window_bounds = array<i64: 33, 12>}, {pipeline_mode = #tpu.pipeline_mode<synchronous>, transform_indices = @transform_3, window_bounds = array<i64: 12, 33>}, {pipeline_mode = #tpu.pipeline_mode<synchronous>, transform_indices = @transform_4, window_bounds = array<i64: 9, 1, 256>}, {pipeline_mode = #tpu.pipeline_mode<synchronous>, transform_indices = @transform_5, window_bounds = array<i64: 9, 8, 12>}, {pipeline_mode = #tpu.pipeline_mode<synchronous>, transform_indices = @transform_6, window_bounds = array<i64: 8, 14>}, {transform_indices = @transform_7, window_bounds = array<i64: 1, 8, 256>}]} {
    %c0 = arith.constant 0 : index
    %c0_0 = arith.constant 0 : index
    %c0_1 = arith.constant 0 : index
    %0 = vector.load %arg1[%c0, %c0_0, %c0_1] : memref<1x4x256xf32, #tpu.memory_space<vmem>>, vector<1x4x256xf32>
    %1 = vector.shape_cast %0 : vector<1x4x256xf32> to vector<4x256xf32>
    %c0_2 = arith.constant 0 : index
    %c0_3 = arith.constant 0 : index
    %c0_4 = arith.constant 0 : index
    %2 = vector.load %arg2[%c0_2, %c0_3, %c0_4] : memref<1x1x33xf32, #tpu.memory_space<vmem>>, vector<1x1x33xf32>
    %3 = vector.shape_cast %2 : vector<1x1x33xf32> to vector<1x33xf32>
    %c0_5 = arith.constant 0 : index
    %c0_6 = arith.constant 0 : index
    %4 = vector.load %arg3[%c0_5, %c0_6] : memref<33x12xf32, #tpu.memory_space<vmem>>, vector<33x12xf32>
    %c0_7 = arith.constant 0 : index
    %c0_8 = arith.constant 0 : index
    %5 = vector.load %arg4[%c0_7, %c0_8] : memref<12x33xf32, #tpu.memory_space<vmem>>, vector<12x33xf32>
    %c0_9 = arith.constant 0 : index
    %c0_10 = arith.constant 0 : index
    %6 = vector.load %arg7[%c0_9, %c0_10] : memref<8x14xf32, #tpu.memory_space<vmem>>, vector<8x14xf32>
    %c0_11 = arith.constant 0 : index
    %c0_12 = arith.constant 0 : index
    %c0_13 = arith.constant 0 : index
    %7 = vector.load %arg5[%c0_11, %c0_12, %c0_13] : memref<9x1x256xf32, #tpu.memory_space<vmem>>, vector<9x1x256xf32>
    %c0_14 = arith.constant 0 : index
    %c0_15 = arith.constant 0 : index
    %c0_16 = arith.constant 0 : index
    %8 = vector.load %arg6[%c0_14, %c0_15, %c0_16] : memref<9x8x12xf32, #tpu.memory_space<vmem>>, vector<9x8x12xf32>
    %cst = arith.constant dense<0.000000e+00> : vector<1x12xf32>
    %9 = tpu.matmul %3, %4, %cst {dimension_numbers = #tpu.dot_dimension_numbers<[1], [0], [0], [1], [0, 0, 1, 1], [], []>} : vector<1x33xf32>, vector<33x12xf32>, vector<1x12xf32> -> vector<1x12xf32>
    %10 = vector.broadcast %3 : vector<1x33xf32> to vector<12x33xf32>
    %11 = arith.mulf %5, %10 : vector<12x33xf32>
    %cst_17 = arith.constant dense<0.000000e+00> : vector<12xf32>
    %12 = vector.multi_reduction <add>, %11, %cst_17 [1] : vector<12x33xf32> to vector<12xf32>
    %13 = vector.shape_cast %12 : vector<12xf32> to vector<12x1xf32>
    %14 = vector.extract_strided_slice %9 {offsets = [0, 0], sizes = [1, 4], strides = [1, 1]} : vector<1x12xf32> to vector<1x4xf32>
    %15 = vector.extract_strided_slice %9 {offsets = [0, 4], sizes = [1, 8], strides = [1, 1]} : vector<1x12xf32> to vector<1x8xf32>
    %16 = vector.extract_strided_slice %13 {offsets = [0, 0], sizes = [4, 1], strides = [1, 1]} : vector<12x1xf32> to vector<4x1xf32>
    %17 = vector.extract_strided_slice %13 {offsets = [4, 0], sizes = [8, 1], strides = [1, 1]} : vector<12x1xf32> to vector<8x1xf32>
    %18 = vector.extract_strided_slice %6 {offsets = [0, 0], sizes = [8, 4], strides = [1, 1]} : vector<8x14xf32> to vector<8x4xf32>
    %19 = vector.extract_strided_slice %6 {offsets = [0, 4], sizes = [8, 8], strides = [1, 1]} : vector<8x14xf32> to vector<8x8xf32>
    %20 = vector.extract_strided_slice %6 {offsets = [0, 12], sizes = [8, 1], strides = [1, 1]} : vector<8x14xf32> to vector<8x1xf32>
    %21 = vector.extract_strided_slice %6 {offsets = [0, 13], sizes = [8, 1], strides = [1, 1]} : vector<8x14xf32> to vector<8x1xf32>
    %22 = arith.mulf %14, %14 : vector<1x4xf32>
    %23 = vector.broadcast %22 : vector<1x4xf32> to vector<8x4xf32>
    %24 = arith.mulf %18, %23 : vector<8x4xf32>
    %cst_18 = arith.constant dense<0.000000e+00> : vector<8xf32>
    %25 = vector.multi_reduction <add>, %24, %cst_18 [1] : vector<8x4xf32> to vector<8xf32>
    %26 = vector.shape_cast %25 : vector<8xf32> to vector<8x1xf32>
    %cst_19 = arith.constant 9.99999974E-6 : f32
    %27 = vector.broadcast %cst_19 : f32 to vector<8x1xf32>
    %28 = arith.addf %26, %27 : vector<8x1xf32>
    %29 = math.rsqrt %28 : vector<8x1xf32>
    %30 = arith.mulf %15, %15 : vector<1x8xf32>
    %31 = vector.broadcast %30 : vector<1x8xf32> to vector<8x8xf32>
    %32 = arith.mulf %19, %31 : vector<8x8xf32>
    %cst_20 = arith.constant dense<0.000000e+00> : vector<8xf32>
    %33 = vector.multi_reduction <add>, %32, %cst_20 [1] : vector<8x8xf32> to vector<8xf32>
    %34 = vector.shape_cast %33 : vector<8xf32> to vector<8x1xf32>
    %cst_21 = arith.constant 9.99999974E-6 : f32
    %35 = vector.broadcast %cst_21 : f32 to vector<8x1xf32>
    %36 = arith.addf %34, %35 : vector<8x1xf32>
    %37 = math.rsqrt %36 : vector<8x1xf32>
    %38 = vector.broadcast %16 : vector<4x1xf32> to vector<4x256xf32>
    %39 = arith.mulf %1, %38 : vector<4x256xf32>
    %c17_i32 = arith.constant 17 : i32
    %40 = tpu.dynamic_rotate %39 by %c17_i32 dim 1 : vector<4x256xf32>, i32 -> vector<4x256xf32>
    %41 = vector.extract_strided_slice %7 {offsets = [0, 0, 0], sizes = [1, 1, 256], strides = [1, 1, 1]} : vector<9x1x256xf32> to vector<1x1x256xf32>
    %42 = vector.shape_cast %41 : vector<1x1x256xf32> to vector<1x256xf32>
    %43 = vector.broadcast %42 : vector<1x256xf32> to vector<4x256xf32>
    %44 = arith.mulf %40, %43 : vector<4x256xf32>
    %45 = vector.extract_strided_slice %8 {offsets = [0, 0, 0], sizes = [1, 8, 12], strides = [1, 1, 1]} : vector<9x8x12xf32> to vector<1x8x12xf32>
    %46 = vector.shape_cast %45 : vector<1x8x12xf32> to vector<8x12xf32>
    %47 = vector.extract_strided_slice %46 {offsets = [0, 0], sizes = [8, 4], strides = [1, 1]} : vector<8x12xf32> to vector<8x4xf32>
    %cst_22 = arith.constant dense<0.000000e+00> : vector<8x256xf32>
    %48 = tpu.matmul %47, %44, %cst_22 {dimension_numbers = #tpu.dot_dimension_numbers<[1], [0], [0], [1], [0, 0, 1, 1], [], []>} : vector<8x4xf32>, vector<4x256xf32>, vector<8x256xf32> -> vector<8x256xf32>
    %c16_i32 = arith.constant 16 : i32
    %49 = tpu.dynamic_rotate %39 by %c16_i32 dim 1 : vector<4x256xf32>, i32 -> vector<4x256xf32>
    %50 = vector.extract_strided_slice %7 {offsets = [1, 0, 0], sizes = [1, 1, 256], strides = [1, 1, 1]} : vector<9x1x256xf32> to vector<1x1x256xf32>
    %51 = vector.shape_cast %50 : vector<1x1x256xf32> to vector<1x256xf32>
    %52 = vector.broadcast %51 : vector<1x256xf32> to vector<4x256xf32>
    %53 = arith.mulf %49, %52 : vector<4x256xf32>
    %54 = vector.extract_strided_slice %8 {offsets = [1, 0, 0], sizes = [1, 8, 12], strides = [1, 1, 1]} : vector<9x8x12xf32> to vector<1x8x12xf32>
    %55 = vector.shape_cast %54 : vector<1x8x12xf32> to vector<8x12xf32>
    %56 = vector.extract_strided_slice %55 {offsets = [0, 0], sizes = [8, 4], strides = [1, 1]} : vector<8x12xf32> to vector<8x4xf32>
    %cst_23 = arith.constant dense<0.000000e+00> : vector<8x256xf32>
    %57 = tpu.matmul %56, %53, %cst_23 {dimension_numbers = #tpu.dot_dimension_numbers<[1], [0], [0], [1], [0, 0, 1, 1], [], []>} : vector<8x4xf32>, vector<4x256xf32>, vector<8x256xf32> -> vector<8x256xf32>
    %58 = arith.addf %48, %57 : vector<8x256xf32>
    %c15_i32 = arith.constant 15 : i32
    %59 = tpu.dynamic_rotate %39 by %c15_i32 dim 1 : vector<4x256xf32>, i32 -> vector<4x256xf32>
    %60 = vector.extract_strided_slice %7 {offsets = [2, 0, 0], sizes = [1, 1, 256], strides = [1, 1, 1]} : vector<9x1x256xf32> to vector<1x1x256xf32>
    %61 = vector.shape_cast %60 : vector<1x1x256xf32> to vector<1x256xf32>
    %62 = vector.broadcast %61 : vector<1x256xf32> to vector<4x256xf32>
    %63 = arith.mulf %59, %62 : vector<4x256xf32>
    %64 = vector.extract_strided_slice %8 {offsets = [2, 0, 0], sizes = [1, 8, 12], strides = [1, 1, 1]} : vector<9x8x12xf32> to vector<1x8x12xf32>
    %65 = vector.shape_cast %64 : vector<1x8x12xf32> to vector<8x12xf32>
    %66 = vector.extract_strided_slice %65 {offsets = [0, 0], sizes = [8, 4], strides = [1, 1]} : vector<8x12xf32> to vector<8x4xf32>
    %cst_24 = arith.constant dense<0.000000e+00> : vector<8x256xf32>
    %67 = tpu.matmul %66, %63, %cst_24 {dimension_numbers = #tpu.dot_dimension_numbers<[1], [0], [0], [1], [0, 0, 1, 1], [], []>} : vector<8x4xf32>, vector<4x256xf32>, vector<8x256xf32> -> vector<8x256xf32>
    %68 = arith.addf %58, %67 : vector<8x256xf32>
    %c1_i32 = arith.constant 1 : i32
    %69 = tpu.dynamic_rotate %39 by %c1_i32 dim 1 : vector<4x256xf32>, i32 -> vector<4x256xf32>
    %70 = vector.extract_strided_slice %7 {offsets = [3, 0, 0], sizes = [1, 1, 256], strides = [1, 1, 1]} : vector<9x1x256xf32> to vector<1x1x256xf32>
    %71 = vector.shape_cast %70 : vector<1x1x256xf32> to vector<1x256xf32>
    %72 = vector.broadcast %71 : vector<1x256xf32> to vector<4x256xf32>
    %73 = arith.mulf %69, %72 : vector<4x256xf32>
    %74 = vector.extract_strided_slice %8 {offsets = [3, 0, 0], sizes = [1, 8, 12], strides = [1, 1, 1]} : vector<9x8x12xf32> to vector<1x8x12xf32>
    %75 = vector.shape_cast %74 : vector<1x8x12xf32> to vector<8x12xf32>
    %76 = vector.extract_strided_slice %75 {offsets = [0, 0], sizes = [8, 4], strides = [1, 1]} : vector<8x12xf32> to vector<8x4xf32>
    %cst_25 = arith.constant dense<0.000000e+00> : vector<8x256xf32>
    %77 = tpu.matmul %76, %73, %cst_25 {dimension_numbers = #tpu.dot_dimension_numbers<[1], [0], [0], [1], [0, 0, 1, 1], [], []>} : vector<8x4xf32>, vector<4x256xf32>, vector<8x256xf32> -> vector<8x256xf32>
    %78 = arith.addf %68, %77 : vector<8x256xf32>
    %79 = vector.extract_strided_slice %8 {offsets = [4, 0, 0], sizes = [1, 8, 12], strides = [1, 1, 1]} : vector<9x8x12xf32> to vector<1x8x12xf32>
    %80 = vector.shape_cast %79 : vector<1x8x12xf32> to vector<8x12xf32>
    %81 = vector.extract_strided_slice %80 {offsets = [0, 0], sizes = [8, 4], strides = [1, 1]} : vector<8x12xf32> to vector<8x4xf32>
    %cst_26 = arith.constant dense<0.000000e+00> : vector<8x256xf32>
    %82 = tpu.matmul %81, %39, %cst_26 {dimension_numbers = #tpu.dot_dimension_numbers<[1], [0], [0], [1], [0, 0, 1, 1], [], []>} : vector<8x4xf32>, vector<4x256xf32>, vector<8x256xf32> -> vector<8x256xf32>
    %83 = arith.addf %78, %82 : vector<8x256xf32>
    %c255_i32 = arith.constant 255 : i32
    %84 = tpu.dynamic_rotate %39 by %c255_i32 dim 1 : vector<4x256xf32>, i32 -> vector<4x256xf32>
    %85 = vector.extract_strided_slice %7 {offsets = [5, 0, 0], sizes = [1, 1, 256], strides = [1, 1, 1]} : vector<9x1x256xf32> to vector<1x1x256xf32>
    %86 = vector.shape_cast %85 : vector<1x1x256xf32> to vector<1x256xf32>
    %87 = vector.broadcast %86 : vector<1x256xf32> to vector<4x256xf32>
    %88 = arith.mulf %84, %87 : vector<4x256xf32>
    %89 = vector.extract_strided_slice %8 {offsets = [5, 0, 0], sizes = [1, 8, 12], strides = [1, 1, 1]} : vector<9x8x12xf32> to vector<1x8x12xf32>
    %90 = vector.shape_cast %89 : vector<1x8x12xf32> to vector<8x12xf32>
    %91 = vector.extract_strided_slice %90 {offsets = [0, 0], sizes = [8, 4], strides = [1, 1]} : vector<8x12xf32> to vector<8x4xf32>
    %cst_27 = arith.constant dense<0.000000e+00> : vector<8x256xf32>
    %92 = tpu.matmul %91, %88, %cst_27 {dimension_numbers = #tpu.dot_dimension_numbers<[1], [0], [0], [1], [0, 0, 1, 1], [], []>} : vector<8x4xf32>, vector<4x256xf32>, vector<8x256xf32> -> vector<8x256xf32>
    %93 = arith.addf %83, %92 : vector<8x256xf32>
    %c241_i32 = arith.constant 241 : i32
    %94 = tpu.dynamic_rotate %39 by %c241_i32 dim 1 : vector<4x256xf32>, i32 -> vector<4x256xf32>
    %95 = vector.extract_strided_slice %7 {offsets = [6, 0, 0], sizes = [1, 1, 256], strides = [1, 1, 1]} : vector<9x1x256xf32> to vector<1x1x256xf32>
    %96 = vector.shape_cast %95 : vector<1x1x256xf32> to vector<1x256xf32>
    %97 = vector.broadcast %96 : vector<1x256xf32> to vector<4x256xf32>
    %98 = arith.mulf %94, %97 : vector<4x256xf32>
    %99 = vector.extract_strided_slice %8 {offsets = [6, 0, 0], sizes = [1, 8, 12], strides = [1, 1, 1]} : vector<9x8x12xf32> to vector<1x8x12xf32>
    %100 = vector.shape_cast %99 : vector<1x8x12xf32> to vector<8x12xf32>
    %101 = vector.extract_strided_slice %100 {offsets = [0, 0], sizes = [8, 4], strides = [1, 1]} : vector<8x12xf32> to vector<8x4xf32>
    %cst_28 = arith.constant dense<0.000000e+00> : vector<8x256xf32>
    %102 = tpu.matmul %101, %98, %cst_28 {dimension_numbers = #tpu.dot_dimension_numbers<[1], [0], [0], [1], [0, 0, 1, 1], [], []>} : vector<8x4xf32>, vector<4x256xf32>, vector<8x256xf32> -> vector<8x256xf32>
    %103 = arith.addf %93, %102 : vector<8x256xf32>
    %c240_i32 = arith.constant 240 : i32
    %104 = tpu.dynamic_rotate %39 by %c240_i32 dim 1 : vector<4x256xf32>, i32 -> vector<4x256xf32>
    %105 = vector.extract_strided_slice %7 {offsets = [7, 0, 0], sizes = [1, 1, 256], strides = [1, 1, 1]} : vector<9x1x256xf32> to vector<1x1x256xf32>
    %106 = vector.shape_cast %105 : vector<1x1x256xf32> to vector<1x256xf32>
    %107 = vector.broadcast %106 : vector<1x256xf32> to vector<4x256xf32>
    %108 = arith.mulf %104, %107 : vector<4x256xf32>
    %109 = vector.extract_strided_slice %8 {offsets = [7, 0, 0], sizes = [1, 8, 12], strides = [1, 1, 1]} : vector<9x8x12xf32> to vector<1x8x12xf32>
    %110 = vector.shape_cast %109 : vector<1x8x12xf32> to vector<8x12xf32>
    %111 = vector.extract_strided_slice %110 {offsets = [0, 0], sizes = [8, 4], strides = [1, 1]} : vector<8x12xf32> to vector<8x4xf32>
    %cst_29 = arith.constant dense<0.000000e+00> : vector<8x256xf32>
    %112 = tpu.matmul %111, %108, %cst_29 {dimension_numbers = #tpu.dot_dimension_numbers<[1], [0], [0], [1], [0, 0, 1, 1], [], []>} : vector<8x4xf32>, vector<4x256xf32>, vector<8x256xf32> -> vector<8x256xf32>
    %113 = arith.addf %103, %112 : vector<8x256xf32>
    %c239_i32 = arith.constant 239 : i32
    %114 = tpu.dynamic_rotate %39 by %c239_i32 dim 1 : vector<4x256xf32>, i32 -> vector<4x256xf32>
    %115 = vector.extract_strided_slice %7 {offsets = [8, 0, 0], sizes = [1, 1, 256], strides = [1, 1, 1]} : vector<9x1x256xf32> to vector<1x1x256xf32>
    %116 = vector.shape_cast %115 : vector<1x1x256xf32> to vector<1x256xf32>
    %117 = vector.broadcast %116 : vector<1x256xf32> to vector<4x256xf32>
    %118 = arith.mulf %114, %117 : vector<4x256xf32>
    %119 = vector.extract_strided_slice %8 {offsets = [8, 0, 0], sizes = [1, 8, 12], strides = [1, 1, 1]} : vector<9x8x12xf32> to vector<1x8x12xf32>
    %120 = vector.shape_cast %119 : vector<1x8x12xf32> to vector<8x12xf32>
    %121 = vector.extract_strided_slice %120 {offsets = [0, 0], sizes = [8, 4], strides = [1, 1]} : vector<8x12xf32> to vector<8x4xf32>
    %cst_30 = arith.constant dense<0.000000e+00> : vector<8x256xf32>
    %122 = tpu.matmul %121, %118, %cst_30 {dimension_numbers = #tpu.dot_dimension_numbers<[1], [0], [0], [1], [0, 0, 1, 1], [], []>} : vector<8x4xf32>, vector<4x256xf32>, vector<8x256xf32> -> vector<8x256xf32>
    %123 = arith.addf %113, %122 : vector<8x256xf32>
    %124 = vector.broadcast %29 : vector<8x1xf32> to vector<8x256xf32>
    %125 = arith.mulf %123, %124 : vector<8x256xf32>
    %126 = vector.broadcast %20 : vector<8x1xf32> to vector<8x256xf32>
    %127 = arith.addf %125, %126 : vector<8x256xf32>
    %cst_31 = arith.constant 0.000000e+00 : f32
    %128 = vector.broadcast %cst_31 : f32 to vector<8x256xf32>
    %129 = arith.cmpf oge, %127, %128 : vector<8x256xf32>
    %cst_32 = arith.constant 2.000000e-01 : f32
    %130 = vector.broadcast %cst_32 : f32 to vector<8x256xf32>
    %131 = arith.mulf %130, %127 : vector<8x256xf32>
    %132 = arith.select %129, %127, %131 : vector<8x256xi1>, vector<8x256xf32>
    %cst_33 = arith.constant 1.41421354 : f32
    %133 = vector.broadcast %cst_33 : f32 to vector<8x256xf32>
    %134 = arith.mulf %132, %133 : vector<8x256xf32>
    %135 = vector.broadcast %17 : vector<8x1xf32> to vector<8x256xf32>
    %136 = arith.mulf %134, %135 : vector<8x256xf32>
    %c17_i32_34 = arith.constant 17 : i32
    %137 = tpu.dynamic_rotate %136 by %c17_i32_34 dim 1 : vector<8x256xf32>, i32 -> vector<8x256xf32>
    %138 = vector.extract_strided_slice %7 {offsets = [0, 0, 0], sizes = [1, 1, 256], strides = [1, 1, 1]} : vector<9x1x256xf32> to vector<1x1x256xf32>
    %139 = vector.shape_cast %138 : vector<1x1x256xf32> to vector<1x256xf32>
    %140 = vector.broadcast %139 : vector<1x256xf32> to vector<8x256xf32>
    %141 = arith.mulf %137, %140 : vector<8x256xf32>
    %142 = vector.extract_strided_slice %8 {offsets = [0, 0, 0], sizes = [1, 8, 12], strides = [1, 1, 1]} : vector<9x8x12xf32> to vector<1x8x12xf32>
    %143 = vector.shape_cast %142 : vector<1x8x12xf32> to vector<8x12xf32>
    %144 = vector.extract_strided_slice %143 {offsets = [0, 4], sizes = [8, 8], strides = [1, 1]} : vector<8x12xf32> to vector<8x8xf32>
    %cst_35 = arith.constant dense<0.000000e+00> : vector<8x256xf32>
    %145 = tpu.matmul %144, %141, %cst_35 {dimension_numbers = #tpu.dot_dimension_numbers<[1], [0], [0], [1], [0, 0, 1, 1], [], []>} : vector<8x8xf32>, vector<8x256xf32>, vector<8x256xf32> -> vector<8x256xf32>
    %c16_i32_36 = arith.constant 16 : i32
    %146 = tpu.dynamic_rotate %136 by %c16_i32_36 dim 1 : vector<8x256xf32>, i32 -> vector<8x256xf32>
    %147 = vector.extract_strided_slice %7 {offsets = [1, 0, 0], sizes = [1, 1, 256], strides = [1, 1, 1]} : vector<9x1x256xf32> to vector<1x1x256xf32>
    %148 = vector.shape_cast %147 : vector<1x1x256xf32> to vector<1x256xf32>
    %149 = vector.broadcast %148 : vector<1x256xf32> to vector<8x256xf32>
    %150 = arith.mulf %146, %149 : vector<8x256xf32>
    %151 = vector.extract_strided_slice %8 {offsets = [1, 0, 0], sizes = [1, 8, 12], strides = [1, 1, 1]} : vector<9x8x12xf32> to vector<1x8x12xf32>
    %152 = vector.shape_cast %151 : vector<1x8x12xf32> to vector<8x12xf32>
    %153 = vector.extract_strided_slice %152 {offsets = [0, 4], sizes = [8, 8], strides = [1, 1]} : vector<8x12xf32> to vector<8x8xf32>
    %cst_37 = arith.constant dense<0.000000e+00> : vector<8x256xf32>
    %154 = tpu.matmul %153, %150, %cst_37 {dimension_numbers = #tpu.dot_dimension_numbers<[1], [0], [0], [1], [0, 0, 1, 1], [], []>} : vector<8x8xf32>, vector<8x256xf32>, vector<8x256xf32> -> vector<8x256xf32>
    %155 = arith.addf %145, %154 : vector<8x256xf32>
    %c15_i32_38 = arith.constant 15 : i32
    %156 = tpu.dynamic_rotate %136 by %c15_i32_38 dim 1 : vector<8x256xf32>, i32 -> vector<8x256xf32>
    %157 = vector.extract_strided_slice %7 {offsets = [2, 0, 0], sizes = [1, 1, 256], strides = [1, 1, 1]} : vector<9x1x256xf32> to vector<1x1x256xf32>
    %158 = vector.shape_cast %157 : vector<1x1x256xf32> to vector<1x256xf32>
    %159 = vector.broadcast %158 : vector<1x256xf32> to vector<8x256xf32>
    %160 = arith.mulf %156, %159 : vector<8x256xf32>
    %161 = vector.extract_strided_slice %8 {offsets = [2, 0, 0], sizes = [1, 8, 12], strides = [1, 1, 1]} : vector<9x8x12xf32> to vector<1x8x12xf32>
    %162 = vector.shape_cast %161 : vector<1x8x12xf32> to vector<8x12xf32>
    %163 = vector.extract_strided_slice %162 {offsets = [0, 4], sizes = [8, 8], strides = [1, 1]} : vector<8x12xf32> to vector<8x8xf32>
    %cst_39 = arith.constant dense<0.000000e+00> : vector<8x256xf32>
    %164 = tpu.matmul %163, %160, %cst_39 {dimension_numbers = #tpu.dot_dimension_numbers<[1], [0], [0], [1], [0, 0, 1, 1], [], []>} : vector<8x8xf32>, vector<8x256xf32>, vector<8x256xf32> -> vector<8x256xf32>
    %165 = arith.addf %155, %164 : vector<8x256xf32>
    %c1_i32_40 = arith.constant 1 : i32
    %166 = tpu.dynamic_rotate %136 by %c1_i32_40 dim 1 : vector<8x256xf32>, i32 -> vector<8x256xf32>
    %167 = vector.extract_strided_slice %7 {offsets = [3, 0, 0], sizes = [1, 1, 256], strides = [1, 1, 1]} : vector<9x1x256xf32> to vector<1x1x256xf32>
    %168 = vector.shape_cast %167 : vector<1x1x256xf32> to vector<1x256xf32>
    %169 = vector.broadcast %168 : vector<1x256xf32> to vector<8x256xf32>
    %170 = arith.mulf %166, %169 : vector<8x256xf32>
    %171 = vector.extract_strided_slice %8 {offsets = [3, 0, 0], sizes = [1, 8, 12], strides = [1, 1, 1]} : vector<9x8x12xf32> to vector<1x8x12xf32>
    %172 = vector.shape_cast %171 : vector<1x8x12xf32> to vector<8x12xf32>
    %173 = vector.extract_strided_slice %172 {offsets = [0, 4], sizes = [8, 8], strides = [1, 1]} : vector<8x12xf32> to vector<8x8xf32>
    %cst_41 = arith.constant dense<0.000000e+00> : vector<8x256xf32>
    %174 = tpu.matmul %173, %170, %cst_41 {dimension_numbers = #tpu.dot_dimension_numbers<[1], [0], [0], [1], [0, 0, 1, 1], [], []>} : vector<8x8xf32>, vector<8x256xf32>, vector<8x256xf32> -> vector<8x256xf32>
    %175 = arith.addf %165, %174 : vector<8x256xf32>
    %176 = vector.extract_strided_slice %8 {offsets = [4, 0, 0], sizes = [1, 8, 12], strides = [1, 1, 1]} : vector<9x8x12xf32> to vector<1x8x12xf32>
    %177 = vector.shape_cast %176 : vector<1x8x12xf32> to vector<8x12xf32>
    %178 = vector.extract_strided_slice %177 {offsets = [0, 4], sizes = [8, 8], strides = [1, 1]} : vector<8x12xf32> to vector<8x8xf32>
    %cst_42 = arith.constant dense<0.000000e+00> : vector<8x256xf32>
    %179 = tpu.matmul %178, %136, %cst_42 {dimension_numbers = #tpu.dot_dimension_numbers<[1], [0], [0], [1], [0, 0, 1, 1], [], []>} : vector<8x8xf32>, vector<8x256xf32>, vector<8x256xf32> -> vector<8x256xf32>
    %180 = arith.addf %175, %179 : vector<8x256xf32>
    %c255_i32_43 = arith.constant 255 : i32
    %181 = tpu.dynamic_rotate %136 by %c255_i32_43 dim 1 : vector<8x256xf32>, i32 -> vector<8x256xf32>
    %182 = vector.extract_strided_slice %7 {offsets = [5, 0, 0], sizes = [1, 1, 256], strides = [1, 1, 1]} : vector<9x1x256xf32> to vector<1x1x256xf32>
    %183 = vector.shape_cast %182 : vector<1x1x256xf32> to vector<1x256xf32>
    %184 = vector.broadcast %183 : vector<1x256xf32> to vector<8x256xf32>
    %185 = arith.mulf %181, %184 : vector<8x256xf32>
    %186 = vector.extract_strided_slice %8 {offsets = [5, 0, 0], sizes = [1, 8, 12], strides = [1, 1, 1]} : vector<9x8x12xf32> to vector<1x8x12xf32>
    %187 = vector.shape_cast %186 : vector<1x8x12xf32> to vector<8x12xf32>
    %188 = vector.extract_strided_slice %187 {offsets = [0, 4], sizes = [8, 8], strides = [1, 1]} : vector<8x12xf32> to vector<8x8xf32>
    %cst_44 = arith.constant dense<0.000000e+00> : vector<8x256xf32>
    %189 = tpu.matmul %188, %185, %cst_44 {dimension_numbers = #tpu.dot_dimension_numbers<[1], [0], [0], [1], [0, 0, 1, 1], [], []>} : vector<8x8xf32>, vector<8x256xf32>, vector<8x256xf32> -> vector<8x256xf32>
    %190 = arith.addf %180, %189 : vector<8x256xf32>
    %c241_i32_45 = arith.constant 241 : i32
    %191 = tpu.dynamic_rotate %136 by %c241_i32_45 dim 1 : vector<8x256xf32>, i32 -> vector<8x256xf32>
    %192 = vector.extract_strided_slice %7 {offsets = [6, 0, 0], sizes = [1, 1, 256], strides = [1, 1, 1]} : vector<9x1x256xf32> to vector<1x1x256xf32>
    %193 = vector.shape_cast %192 : vector<1x1x256xf32> to vector<1x256xf32>
    %194 = vector.broadcast %193 : vector<1x256xf32> to vector<8x256xf32>
    %195 = arith.mulf %191, %194 : vector<8x256xf32>
    %196 = vector.extract_strided_slice %8 {offsets = [6, 0, 0], sizes = [1, 8, 12], strides = [1, 1, 1]} : vector<9x8x12xf32> to vector<1x8x12xf32>
    %197 = vector.shape_cast %196 : vector<1x8x12xf32> to vector<8x12xf32>
    %198 = vector.extract_strided_slice %197 {offsets = [0, 4], sizes = [8, 8], strides = [1, 1]} : vector<8x12xf32> to vector<8x8xf32>
    %cst_46 = arith.constant dense<0.000000e+00> : vector<8x256xf32>
    %199 = tpu.matmul %198, %195, %cst_46 {dimension_numbers = #tpu.dot_dimension_numbers<[1], [0], [0], [1], [0, 0, 1, 1], [], []>} : vector<8x8xf32>, vector<8x256xf32>, vector<8x256xf32> -> vector<8x256xf32>
    %200 = arith.addf %190, %199 : vector<8x256xf32>
    %c240_i32_47 = arith.constant 240 : i32
    %201 = tpu.dynamic_rotate %136 by %c240_i32_47 dim 1 : vector<8x256xf32>, i32 -> vector<8x256xf32>
    %202 = vector.extract_strided_slice %7 {offsets = [7, 0, 0], sizes = [1, 1, 256], strides = [1, 1, 1]} : vector<9x1x256xf32> to vector<1x1x256xf32>
    %203 = vector.shape_cast %202 : vector<1x1x256xf32> to vector<1x256xf32>
    %204 = vector.broadcast %203 : vector<1x256xf32> to vector<8x256xf32>
    %205 = arith.mulf %201, %204 : vector<8x256xf32>
    %206 = vector.extract_strided_slice %8 {offsets = [7, 0, 0], sizes = [1, 8, 12], strides = [1, 1, 1]} : vector<9x8x12xf32> to vector<1x8x12xf32>
    %207 = vector.shape_cast %206 : vector<1x8x12xf32> to vector<8x12xf32>
    %208 = vector.extract_strided_slice %207 {offsets = [0, 4], sizes = [8, 8], strides = [1, 1]} : vector<8x12xf32> to vector<8x8xf32>
    %cst_48 = arith.constant dense<0.000000e+00> : vector<8x256xf32>
    %209 = tpu.matmul %208, %205, %cst_48 {dimension_numbers = #tpu.dot_dimension_numbers<[1], [0], [0], [1], [0, 0, 1, 1], [], []>} : vector<8x8xf32>, vector<8x256xf32>, vector<8x256xf32> -> vector<8x256xf32>
    %210 = arith.addf %200, %209 : vector<8x256xf32>
    %c239_i32_49 = arith.constant 239 : i32
    %211 = tpu.dynamic_rotate %136 by %c239_i32_49 dim 1 : vector<8x256xf32>, i32 -> vector<8x256xf32>
    %212 = vector.extract_strided_slice %7 {offsets = [8, 0, 0], sizes = [1, 1, 256], strides = [1, 1, 1]} : vector<9x1x256xf32> to vector<1x1x256xf32>
    %213 = vector.shape_cast %212 : vector<1x1x256xf32> to vector<1x256xf32>
    %214 = vector.broadcast %213 : vector<1x256xf32> to vector<8x256xf32>
    %215 = arith.mulf %211, %214 : vector<8x256xf32>
    %216 = vector.extract_strided_slice %8 {offsets = [8, 0, 0], sizes = [1, 8, 12], strides = [1, 1, 1]} : vector<9x8x12xf32> to vector<1x8x12xf32>
    %217 = vector.shape_cast %216 : vector<1x8x12xf32> to vector<8x12xf32>
    %218 = vector.extract_strided_slice %217 {offsets = [0, 4], sizes = [8, 8], strides = [1, 1]} : vector<8x12xf32> to vector<8x8xf32>
    %cst_50 = arith.constant dense<0.000000e+00> : vector<8x256xf32>
    %219 = tpu.matmul %218, %215, %cst_50 {dimension_numbers = #tpu.dot_dimension_numbers<[1], [0], [0], [1], [0, 0, 1, 1], [], []>} : vector<8x8xf32>, vector<8x256xf32>, vector<8x256xf32> -> vector<8x256xf32>
    %220 = arith.addf %210, %219 : vector<8x256xf32>
    %221 = vector.broadcast %37 : vector<8x1xf32> to vector<8x256xf32>
    %222 = arith.mulf %220, %221 : vector<8x256xf32>
    %223 = vector.broadcast %21 : vector<8x1xf32> to vector<8x256xf32>
    %224 = arith.addf %222, %223 : vector<8x256xf32>
    %cst_51 = arith.constant 0.000000e+00 : f32
    %225 = vector.broadcast %cst_51 : f32 to vector<8x256xf32>
    %226 = arith.cmpf oge, %224, %225 : vector<8x256xf32>
    %cst_52 = arith.constant 2.000000e-01 : f32
    %227 = vector.broadcast %cst_52 : f32 to vector<8x256xf32>
    %228 = arith.mulf %227, %224 : vector<8x256xf32>
    %229 = arith.select %226, %224, %228 : vector<8x256xi1>, vector<8x256xf32>
    %cst_53 = arith.constant 1.41421354 : f32
    %230 = vector.broadcast %cst_53 : f32 to vector<8x256xf32>
    %231 = arith.mulf %229, %230 : vector<8x256xf32>
    %c0_54 = arith.constant 0 : index
    %c0_55 = arith.constant 0 : index
    %c0_56 = arith.constant 0 : index
    %232 = vector.load %arg8[%c0_54, %c0_55, %c0_56] : memref<1x8x256xf32, #tpu.memory_space<vmem>>, vector<1x8x256xf32>
    %233 = vector.shape_cast %232 : vector<1x8x256xf32> to vector<8x256xf32>
    %234 = vector.shape_cast %231 : vector<8x256xf32> to vector<1x8x256xf32>
    tpu.vector_store %arg8[%c0_54, %c0_55, %c0_56], %234 {strides = array<i32>} : memref<1x8x256xf32, #tpu.memory_space<vmem>>, vector<1x8x256xf32>,
    return
  }
  func.func @transform_0(%arg0: i32) -> (i32, i32, i32) {
    %c0_i32 = arith.constant 0 : i32
    %c0_i32_0 = arith.constant 0 : i32
    %c0_i32_1 = arith.constant 0 : i32
    return %arg0, %c0_i32, %c0_i32_0 : i32, i32, i32
  }
  func.func @transform_1(%arg0: i32) -> (i32, i32, i32) {
    %c0_i32 = arith.constant 0 : i32
    %c0_i32_0 = arith.constant 0 : i32
    %c0_i32_1 = arith.constant 0 : i32
    return %arg0, %c0_i32, %c0_i32_0 : i32, i32, i32
  }
  func.func @transform_2(%arg0: i32) -> (i32, i32) {
    %c0_i32 = arith.constant 0 : i32
    %c0_i32_0 = arith.constant 0 : i32
    %c0_i32_1 = arith.constant 0 : i32
    return %c0_i32, %c0_i32_0 : i32, i32
  }
  func.func @transform_3(%arg0: i32) -> (i32, i32) {
    %c0_i32 = arith.constant 0 : i32
    %c0_i32_0 = arith.constant 0 : i32
    %c0_i32_1 = arith.constant 0 : i32
    return %c0_i32, %c0_i32_0 : i32, i32
  }
  func.func @transform_4(%arg0: i32) -> (i32, i32, i32) {
    %c0_i32 = arith.constant 0 : i32
    %c0_i32_0 = arith.constant 0 : i32
    %c0_i32_1 = arith.constant 0 : i32
    %c0_i32_2 = arith.constant 0 : i32
    return %c0_i32, %c0_i32_0, %c0_i32_1 : i32, i32, i32
  }
  func.func @transform_5(%arg0: i32) -> (i32, i32, i32) {
    %c0_i32 = arith.constant 0 : i32
    %c0_i32_0 = arith.constant 0 : i32
    %c0_i32_1 = arith.constant 0 : i32
    %c0_i32_2 = arith.constant 0 : i32
    return %c0_i32, %c0_i32_0, %c0_i32_1 : i32, i32, i32
  }
  func.func @transform_6(%arg0: i32) -> (i32, i32) {
    %c0_i32 = arith.constant 0 : i32
    %c0_i32_0 = arith.constant 0 : i32
    %c0_i32_1 = arith.constant 0 : i32
    return %c0_i32, %c0_i32_0 : i32, i32
  }
  func.func @transform_7(%arg0: i32) -> (i32, i32, i32) {
    %c0_i32 = arith.constant 0 : i32
    %c0_i32_0 = arith.constant 0 : i32
    %c0_i32_1 = arith.constant 0 : i32
    return %arg0, %c0_i32, %c0_i32_0 : i32, i32, i32
  }
}

</mosaic_0001>

<llo_original>
// kernel: styled_conv_block.1
$region0: #{styled_conv_block.1}
  #allocation0 [shape = 'u32[]', space=smem, size = 0x4, offset = 0x4, fixed_abs, tag = 'smem constant byte address 0x4 - core index']
  #allocation1 [shape = 'u32[144,128]{1,0:T(1,128)}', space=vmem, size = 0x12000, scoped, tag = 'internal scratch']
  %s0 = inlined_call_operand.vmem [shape: f32[2,4,256], index: 0, kind: input, shape index: {}]
  %s1 = inlined_call_operand.vmem [shape: f32[2,1,33], index: 1, kind: input, shape index: {}]
  %s2 = inlined_call_operand.vmem [shape: f32[33,12], index: 2, kind: input, shape index: {}]
  %s3 = inlined_call_operand.vmem [shape: f32[12,33], index: 3, kind: input, shape index: {}]
  %s4 = inlined_call_operand.vmem [shape: f32[9,1,256], index: 4, kind: input, shape index: {}]
  %s5 = inlined_call_operand.vmem [shape: f32[9,8,12], index: 5, kind: input, shape index: {}]
  %s6 = inlined_call_operand.vmem [shape: f32[8,14], index: 6, kind: input, shape index: {}]
  %s7 = inlined_call_operand.vmem [shape: f32[2,8,256], index: 7, kind: output, shape index: {}]
  %s8 = sld [smem:[#allocation0]]
  $region61: #{styled_conv_block.1} parent=0
    _
  %s10 = ssub.s32 1, %s8
  %s11 = scalar_select 0, %s10, %s8
  loop: start=0, step=1, limit=4
  $region2: #{styled_conv_block.1} parent=0 // loop_pre_header
    _
  $region3: #{styled_conv_block.1} parent=0 // loop_header
    %s13 = sphi 0, %s17
    %p14 = scmp.ge.s32.totalorder %s13, 4
    %s23 = sphi 0, %s25
    %s26 = sphi 0, %s23
    %s27 = sphi 0, %s26
    %s43 = sphi 0, %s27
    %s49 = sphi 0, %s51
    %s52 = sphi 0, %s49
    %s53 = sphi 0, %s52
    %s69 = sphi 0, %s53
    %s73 = sphi 0, %s73
    %s75 = sphi 0, %s73
    %s76 = sphi 0, %s75
    %s90 = sphi 0, %s76
    %s94 = sphi 0, %s94
    %s96 = sphi 0, %s94
    %s97 = sphi 0, %s96
    %s111 = sphi 0, %s97
    %s115 = sphi 0, %s115
    %s117 = sphi 0, %s115
    %s118 = sphi 0, %s117
    %s132 = sphi 0, %s118
    %s136 = sphi 0, %s136
    %s138 = sphi 0, %s136
    %s139 = sphi 0, %s138
    %s153 = sphi 0, %s139
    %s157 = sphi 0, %s157
    %s159 = sphi 0, %s157
    %s160 = sphi 0, %s159
    %s174 = sphi 0, %s160
    %s180 = sphi 0, %s182
    %s183 = sphi 0, %s180
    %s184 = sphi 0, %s183
    %s200 = sphi 0, %s184
  $region4: #{styled_conv_block.1} parent=0 // loop_header_branch
    %16 = sbr.rel (%p14) target = $region8
  $region5: #{styled_conv_block.1} parent=0 // loop_body
    %s18 = ssub.s32 %s13, 1
    %s19 = ssub.s32 %s13, 2
    %s20 = sadd.s32 %s13, 1
    %s21 = ssub.s32 %s13, %s20
    %p22 = scmp.eq.s32.totalorder %s21, 0
    %s24 = sadd.s32 %s23, 1
    %s25 = scalar_select %p22, %s23, %s24
    %p28 = pneg %p22
    %p29 = scmp.eq.s32.totalorder %s13, 1
    %p30 = por %p28, %p29
    %p31 = scmp.ne.s32.totalorder %s23, %s26
    %p32 = scmp.eq.s32.totalorder %s13, 0
    %p33 = por %p31, %p32
    %p34 = scmp.ne.s32.totalorder %s23, %s26
    %p35 = scmp.eq.s32.totalorder %s18, 1
    %p36 = por %p34, %p35
    %p37 = scmp.ne.s32.totalorder %s26, %s27
    %p38 = scmp.eq.s32.totalorder %s18, 0
    %p39 = por %p37, %p38
    %p40 = scmp.ne.s32.totalorder %s26, %s27
    %p41 = scmp.eq.s32.totalorder %s19, 1
    %p42 = por %p40, %p41
    %p44 = scmp.ne.s32.totalorder %s27, %s43
    %p45 = scmp.eq.s32.totalorder %s19, 0
    %p46 = por %p44, %p45
    %s47 = ssub.s32 %s13, %s20
    %p48 = scmp.eq.s32.totalorder %s47, 0
    %s50 = sadd.s32 %s49, 1
    %s51 = scalar_select %p48, %s49, %s50
    %p54 = pneg %p48
    %p55 = scmp.eq.s32.totalorder %s13, 1
    %p56 = por %p54, %p55
    %p57 = scmp.ne.s32.totalorder %s49, %s52
    %p58 = scmp.eq.s32.totalorder %s13, 0
    %p59 = por %p57, %p58
    %p60 = scmp.ne.s32.totalorder %s49, %s52
    %p61 = scmp.eq.s32.totalorder %s18, 1
    %p62 = por %p60, %p61
    %p63 = scmp.ne.s32.totalorder %s52, %s53
    %p64 = scmp.eq.s32.totalorder %s18, 0
    %p65 = por %p63, %p64
    %p66 = scmp.ne.s32.totalorder %s52, %s53
    %p67 = scmp.eq.s32.totalorder %s19, 1
    %p68 = por %p66, %p67
    %p70 = scmp.ne.s32.totalorder %s53, %s69
    %p71 = scmp.eq.s32.totalorder %s19, 0
    %p72 = por %p70, %p71
    %s74 = sadd.s32 %s73, 1
    %p77 = scmp.eq.s32.totalorder %s13, 1
    %p78 = scmp.ne.s32.totalorder %s73, %s75
    %p79 = scmp.eq.s32.totalorder %s13, 0
    %p80 = por %p78, %p79
    %p81 = scmp.ne.s32.totalorder %s73, %s75
    %p82 = scmp.eq.s32.totalorder %s18, 1
    %p83 = por %p81, %p82
    %p84 = scmp.ne.s32.totalorder %s75, %s76
    %p85 = scmp.eq.s32.totalorder %s18, 0
    %p86 = por %p84, %p85
    %p87 = scmp.ne.s32.totalorder %s75, %s76
    %p88 = scmp.eq.s32.totalorder %s19, 1
    %p89 = por %p87, %p88
    %p91 = scmp.ne.s32.totalorder %s76, %s90
    %p92 = scmp.eq.s32.totalorder %s19, 0
    %p93 = por %p91, %p92
    %s95 = sadd.s32 %s94, 1
    %p98 = scmp.eq.s32.totalorder %s13, 1
    %p99 = scmp.ne.s32.totalorder %s94, %s96
    %p100 = scmp.eq.s32.totalorder %s13, 0
    %p101 = por %p99, %p100
    %p102 = scmp.ne.s32.totalorder %s94, %s96
    %p103 = scmp.eq.s32.totalorder %s18, 1
    %p104 = por %p102, %p103
    %p105 = scmp.ne.s32.totalorder %s96, %s97
    %p106 = scmp.eq.s32.totalorder %s18, 0
    %p107 = por %p105, %p106
    %p108 = scmp.ne.s32.totalorder %s96, %s97
    %p109 = scmp.eq.s32.totalorder %s19, 1
    %p110 = por %p108, %p109
    %p112 = scmp.ne.s32.totalorder %s97, %s111
    %p113 = scmp.eq.s32.totalorder %s19, 0
    %p114 = por %p112, %p113
    %s116 = sadd.s32 %s115, 1
    %p119 = scmp.eq.s32.totalorder %s13, 1
    %p120 = scmp.ne.s32.totalorder %s115, %s117
    %p121 = scmp.eq.s32.totalorder %s13, 0
    %p122 = por %p120, %p121
    %p123 = scmp.ne.s32.totalorder %s115, %s117
    %p124 = scmp.eq.s32.totalorder %s18, 1
    %p125 = por %p123, %p124
    %p126 = scmp.ne.s32.totalorder %s117, %s118
    %p127 = scmp.eq.s32.totalorder %s18, 0
    %p128 = por %p126, %p127
    %p129 = scmp.ne.s32.totalorder %s117, %s118
    %p130 = scmp.eq.s32.totalorder %s19, 1
    %p131 = por %p129, %p130
    %p133 = scmp.ne.s32.totalorder %s118, %s132
    %p134 = scmp.eq.s32.totalorder %s19, 0
    %p135 = por %p133, %p134
    %s137 = sadd.s32 %s136, 1
    %p140 = scmp.eq.s32.totalorder %s13, 1
    %p141 = scmp.ne.s32.totalorder %s136, %s138
    %p142 = scmp.eq.s32.totalorder %s13, 0
    %p143 = por %p141, %p142
    %p144 = scmp.ne.s32.totalorder %s136, %s138
    %p145 = scmp.eq.s32.totalorder %s18, 1
    %p146 = por %p144, %p145
    %p147 = scmp.ne.s32.totalorder %s138, %s139
    %p148 = scmp.eq.s32.totalorder %s18, 0
    %p149 = por %p147, %p148
    %p150 = scmp.ne.s32.totalorder %s138, %s139
    %p151 = scmp.eq.s32.totalorder %s19, 1
    %p152 = por %p150, %p151
    %p154 = scmp.ne.s32.totalorder %s139, %s153
    %p155 = scmp.eq.s32.totalorder %s19, 0
    %p156 = por %p154, %p155
    %s158 = sadd.s32 %s157, 1
    %p161 = scmp.eq.s32.totalorder %s13, 1
    %p162 = scmp.ne.s32.totalorder %s157, %s159
    %p163 = scmp.eq.s32.totalorder %s13, 0
    %p164 = por %p162, %p163
    %p165 = scmp.ne.s32.totalorder %s157, %s159
    %p166 = scmp.eq.s32.totalorder %s18, 1
    %p167 = por %p165, %p166
    %p168 = scmp.ne.s32.totalorder %s159, %s160
    %p169 = scmp.eq.s32.totalorder %s18, 0
    %p170 = por %p168, %p169
    %p171 = scmp.ne.s32.totalorder %s159, %s160
    %p172 = scmp.eq.s32.totalorder %s19, 1
    %p173 = por %p171, %p172
    %p175 = scmp.ne.s32.totalorder %s160, %s174
    %p176 = scmp.eq.s32.totalorder %s19, 0
    %p177 = por %p175, %p176
    %s178 = ssub.s32 %s13, %s20
    %p179 = scmp.eq.s32.totalorder %s178, 0
    %s181 = sadd.s32 %s180, 1
    %s182 = scalar_select %p179, %s180, %s181
    %p185 = pneg %p179
    %p186 = scmp.eq.s32.totalorder %s13, 1
    %p187 = por %p185, %p186
    %p188 = scmp.ne.s32.totalorder %s180, %s183
    %p189 = scmp.eq.s32.totalorder %s13, 0
    %p190 = por %p188, %p189
    %p191 = scmp.ne.s32.totalorder %s180, %s183
    %p192 = scmp.eq.s32.totalorder %s18, 1
    %p193 = por %p191, %p192
    %p194 = scmp.ne.s32.totalorder %s183, %s184
    %p195 = scmp.eq.s32.totalorder %s18, 0
    %p196 = por %p194, %p195
    %p197 = scmp.ne.s32.totalorder %s183, %s184
    %p198 = scmp.eq.s32.totalorder %s19, 1
    %p199 = por %p197, %p198
    %p201 = scmp.ne.s32.totalorder %s184, %s200
    %p202 = scmp.eq.s32.totalorder %s19, 0
    %p203 = por %p201, %p202
    %p204 = scmp.le.s32.totalorder 1, %s13
    %p205 = scmp.lt.s32.totalorder %s13, 3
    %p206 = pnand %p204, %p205
    %p207 = pneg %p206
    // Predicated region
    $region9: #{styled_conv_block.1} parent=5 // pred_check
      _
    $region10: #{styled_conv_block.1} parent=5 // pred_check_branch
      %209 = sbr.rel (%p206) target = $region12
    $region11: #{styled_conv_block.1} parent=5 // pred_region
      %s210 = ssub.s32 %s13, 1
      // Predicated region
      $region13: #{styled_conv_block.1} parent=11 // pred_check
        %p211 = pneg %p86
      $region14: #{styled_conv_block.1} parent=11 // pred_check_branch
        %213 = sbr.rel (%p211) target = $region16
      $region15: #{styled_conv_block.1} parent=11 // pred_region
        _
      $region16: #{styled_conv_block.1} parent=11 // pred_fallthru
        _
      // Predicated region
      $region17: #{styled_conv_block.1} parent=11 // pred_check
        %p214 = pneg %p107
      $region18: #{styled_conv_block.1} parent=11 // pred_check_branch
        %216 = sbr.rel (%p214) target = $region20
      $region19: #{styled_conv_block.1} parent=11 // pred_region
        _
      $region20: #{styled_conv_block.1} parent=11 // pred_fallthru
        _
      // Predicated region
      $region21: #{styled_conv_block.1} parent=11 // pred_check
        %p217 = pneg %p128
      $region22: #{styled_conv_block.1} parent=11 // pred_check_branch
        %219 = sbr.rel (%p217) target = $region24
      $region23: #{styled_conv_block.1} parent=11 // pred_region
        _
      $region24: #{styled_conv_block.1} parent=11 // pred_fallthru
        _
      // Predicated region
      $region25: #{styled_conv_block.1} parent=11 // pred_check
        %p220 = pneg %p149
      $region26: #{styled_conv_block.1} parent=11 // pred_check_branch
        %222 = sbr.rel (%p220) target = $region28
      $region27: #{styled_conv_block.1} parent=11 // pred_region
        _
      $region28: #{styled_conv_block.1} parent=11 // pred_fallthru
        _
      // Predicated region
      $region29: #{styled_conv_block.1} parent=11 // pred_check
        %p223 = pneg %p170
      $region30: #{styled_conv_block.1} parent=11 // pred_check_branch
        %225 = sbr.rel (%p223) target = $region32
      $region31: #{styled_conv_block.1} parent=11 // pred_region
        _
      $region32: #{styled_conv_block.1} parent=11 // pred_fallthru
        _
    $region12: #{styled_conv_block.1} parent=5 // pred_fallthru
      _
    %p226 = scmp.lt.s32.totalorder %s13, 2
    // Predicated region
    $region33: #{styled_conv_block.1} parent=5 // pred_check
      %p227 = pneg %p226
    $region34: #{styled_conv_block.1} parent=5 // pred_check_branch
      %229 = sbr.rel (%p227) target = $region36
    $region35: #{styled_conv_block.1} parent=5 // pred_region
      // Predicated region
      $region37: #{styled_conv_block.1} parent=35 // pred_check
        %p230 = pneg %p33
      $region38: #{styled_conv_block.1} parent=35 // pred_check_branch
        %232 = sbr.rel (%p230) target = $region40
      $region39: #{styled_conv_block.1} parent=35 // pred_region
        %p233 = scmp.lt.s32.totalorder %s13, 1
        %s234 = scalar_select %p233, %s13, 1
        %s235 = smul.addr %s234, 2
        %s236 = smul.addr %s235, 4
        %s237 = scalar_lea.vmem %s0, %s236
      $region40: #{styled_conv_block.1} parent=35 // pred_fallthru
        _
      // Predicated region
      $region41: #{styled_conv_block.1} parent=35 // pred_check
        %p238 = pneg %p59
      $region42: #{styled_conv_block.1} parent=35 // pred_check_branch
        %240 = sbr.rel (%p238) target = $region44
      $region43: #{styled_conv_block.1} parent=35 // pred_region
        %p241 = scmp.lt.s32.totalorder %s13, 1
        %s242 = scalar_select %p241, %s13, 1
        %s243 = scalar_lea.vmem %s1, %s242
      $region44: #{styled_conv_block.1} parent=35 // pred_fallthru
        _
    $region36: #{styled_conv_block.1} parent=5 // pred_fallthru
      _
    %p244 = scmp.le.s32.totalorder 1, %s13
    %p245 = scmp.lt.s32.totalorder %s13, 3
    %p246 = pnand %p244, %p245
    %p247 = pneg %p246
    // Predicated region
    $region45: #{styled_conv_block.1} parent=5 // pred_check
      _
    $region46: #{styled_conv_block.1} parent=5 // pred_check_branch
      %249 = sbr.rel (%p246) target = $region48
    $region47: #{styled_conv_block.1} parent=5 // pred_region
      %s250 = ssub.s32 %s13, 1
      %p251 = scmp.lt.s32.totalorder %s18, 1
      %s252 = scalar_select %p251, %s18, 1
      %s253 = smul.addr %s252, 2
      %s254 = smul.addr %s253, 4
      %s255 = scalar_lea.vmem %s0, %s254
      %p256 = pneg %p39
      %p257 = pneg %p36
      %p258 = scmp.lt.s32.totalorder %s18, 1
      %s259 = scalar_select %p258, %s18, 1
      %s260 = scalar_lea.vmem %s1, %s259
      %p261 = pneg %p65
      %p262 = pneg %p62
      %p263 = pneg %p86
      %p264 = pneg %p83
      %p265 = pneg %p107
      %p266 = pneg %p104
      %p267 = pneg %p128
      %p268 = pneg %p125
      %p269 = pneg %p149
      %p270 = pneg %p146
      %p271 = pneg %p170
      %p272 = pneg %p167
      %p273 = pneg %p196
      %p274 = pneg %p193
      %p275 = scmp.lt.s32.totalorder %s18, 1
      %s276 = scalar_select %p275, %s18, 1
      %s277 = smul.addr %s276, 2
      %s278 = smul.addr %s277, 8
      %s279 = scalar_lea.vmem %s7, %s278
      %p280 = scmp.lt.s32.totalorder %s18, 1
      %s281 = scalar_select %p280, %s18, 1
      %s282 = smul.addr %s281, 2
      %s283 = smul.addr %s282, 4
      %s284 = scalar_lea.vmem %s0, %s283
      %p285 = scmp.lt.s32.totalorder %s18, 1
      %s286 = scalar_select %p285, %s18, 1
      %s287 = scalar_lea.vmem %s1, %s286
      %p288 = scmp.lt.s32.totalorder %s18, 1
      %s289 = scalar_select %p288, %s18, 1
      %s290 = smul.addr %s289, 2
      %s291 = smul.addr %s290, 8
      %s292 = scalar_lea.vmem %s7, %s291
      %v293 = vld [vmem:[%s284] sm:$0xff]
      %v294 = vld [vmem:[%s287] sm:$0x1]
      %v295 = vld [vmem:[%s2] sm:$0xff]
      %v296 = vld [vmem:[%s2 + $0x8] sm:$0xff]
      %v297 = vld [vmem:[%s2 + $0x10] sm:$0xff]
      %v298 = vld [vmem:[%s2 + $0x18] sm:$0xff]
      %v299 = vld [vmem:[%s2 + $0x20] sm:$0x1]
      %v300 = vld [vmem:[%s3] sm:$0xff]
      %v301 = vld [vmem:[%s3 + $0x8] sm:$0xf]
      %v302 = vld [vmem:[%s6] sm:$0xff]
      %v303 = vld [vmem:[%s4] sm:$0x3]
      %v304 = vld [vmem:[%s4 + $0x2] sm:$0x3]
      %v305 = vld [vmem:[%s4 + $0x4] sm:$0x3]
      %v306 = vld [vmem:[%s4 + $0x6] sm:$0x3]
      %v307 = vld [vmem:[%s4 + $0xa] sm:$0x3]
      %v308 = vld [vmem:[%s4 + $0xc] sm:$0x3]
      %v309 = vld [vmem:[%s4 + $0xe] sm:$0x3]
      %v310 = vld [vmem:[%s4 + $0x10] sm:$0x3]
      %v311 = vld [vmem:[%s5] sm:$0xff]
      %v312 = vld [vmem:[%s5 + $0x8] sm:$0xff]
      %v313 = vld [vmem:[%s5 + $0x10] sm:$0xff]
      %v314 = vld [vmem:[%s5 + $0x18] sm:$0xff]
      %v315 = vld [vmem:[%s5 + $0x20] sm:$0xff]
      %v316 = vld [vmem:[%s5 + $0x28] sm:$0xff]
      %v317 = vld [vmem:[%s5 + $0x30] sm:$0xff]
      %v318 = vld [vmem:[%s5 + $0x38] sm:$0xff]
      %v319 = vld [vmem:[%s5 + $0x40] sm:$0xff]
      %vm320 = vcmask 269312
      %v322 = vsel %vm320, %v294, 0
      %vm324 = vcmask 1040384
      %v326 = vsel %vm324, %v299, 0
      %328 = vmatprep.subr.mxu0 0.0
      %329 = vmatpush1.msra.mxu0 0.0
      %330 = vmatprep.subr.mxu0 0.0
      %331 = vmatpush1.msra.mxu0 0.0
      %332 = vmatprep.subr.mxu0 0.0
      %333 = vmatpush1.msra.mxu0 0.0
      %334 = vmatprep.subr.mxu0 0.0
      %335 = vmatpush1.msra.mxu0 0.0
      %336 = vmatprep.subr.mxu0 0.0
      %337 = vmatpush1.msra.mxu0 0.0
      %338 = vmatprep.subr.mxu0 0.0
      %339 = vmatpush1.msra.mxu0 0.0
      %340 = vmatprep.subr.mxu0 0.0
      %341 = vmatpush1.msra.mxu0 0.0
      %342 = vmatprep.subr.mxu0 0.0
      %343 = vmatpush1.msra.mxu0 0.0
      %344 = vmatprep.subr.mxu0 0.0
      %345 = vmatpush1.msra.mxu0 0.0
      %346 = vmatprep.subr.mxu0 0.0
      %347 = vmatpush1.msra.mxu0 0.0
      %348 = vmatprep.subr.mxu0 0.0
      %349 = vmatpush1.msra.mxu0 0.0
      %350 = vmatprep.subr.mxu0 0.0
      %351 = vmatpush1.msra.mxu0 %v326
      %352 = vmatprep.subr.mxu0 0.0
      %353 = vmatpush1.msra.mxu0 %v298
      %354 = vmatprep.subr.mxu0 0.0
      %355 = vmatpush1.msra.mxu0 %v297
      %356 = vmatprep.subr.mxu0 0.0
      %357 = vmatpush1.msra.mxu0 %v296
      %358 = vmatprep.subr.mxu0 0.0
      %359 = vmatpush1.msra.mxu0 %v295
      %360 = vmatprep.subr.mxu0 0.0
      %361 = vmatpush2.msra.mxu0 0.0
      %362 = vmatprep.subr.mxu0 0.0
      %363 = vmatpush2.msra.mxu0 0.0
      %364 = vmatprep.subr.mxu0 0.0
      %365 = vmatpush2.msra.mxu0 0.0
      %366 = vmatprep.subr.mxu0 0.0
      %367 = vmatpush2.msra.mxu0 0.0
      %368 = vmatprep.subr.mxu0 0.0
      %369 = vmatpush2.msra.mxu0 0.0
      %370 = vmatprep.subr.mxu0 0.0
      %371 = vmatpush2.msra.mxu0 0.0
      %372 = vmatprep.subr.mxu0 0.0
      %373 = vmatpush2.msra.mxu0 0.0
      %374 = vmatprep.subr.mxu0 0.0
      %375 = vmatpush2.msra.mxu0 0.0
      %376 = vmatprep.subr.mxu0 0.0
      %377 = vmatpush2.msra.mxu0 0.0
      %378 = vmatprep.subr.mxu0 0.0
      %379 = vmatpush2.msra.mxu0 0.0
      %380 = vmatprep.subr.mxu0 0.0
      %381 = vmatpush2.msra.mxu0 0.0
      %382 = vmatprep.subr.mxu0 0.0
      %383 = vmatpush2.msra.mxu0 0.0
      %384 = vmatprep.subr.mxu0 0.0
      %385 = vmatpush2.msra.mxu0 0.0
      %386 = vmatprep.subr.mxu0 0.0
      %387 = vmatpush2.msra.mxu0 0.0
      %388 = vmatprep.subr.mxu0 0.0
      %389 = vmatpush2.msra.mxu0 0.0
      %390 = vmatprep.subr.mxu0 0.0
      %391 = vmatpush2.msra.mxu0 0.0
      %392 = vmatprep.mubr.f32.mxu0 0.0
      %393 = vmatmul.mubr.f32.gmra.mxu0 %v322
      %v394 = vpop.f32.mrf.mxu0
      %v395 = vadd.f32 0.0, %v394
      %v396 = vpop.f32.mrf.mxu0
      %397 = vdwg.mxu0
      %v398 = vlaneseq
      %v399 = vshrl.u32 %v398, 7
      %v400 = vsub.s32 0, %v399
      %v401 = vrot.slane %v294, %v400
      %v403 = vmul.f32 %v300, %v401
      %v404 = vmul.f32 %v301, %v401
      %v405 = vsel %vm320, %v403, 0.0
      %406 = vadd.xlane.f32.xlu0 %v405
      %v407 = vpop.xlane.xlu0 %406
      %vm408 = vcmask 265216
      %v409 = vsel %vm408, %v404, 0.0
      %410 = vadd.xlane.f32.xlu0 %v409
      %v411 = vpop.xlane.xlu0 %410
      %v412 = vmul.f32 %v395, %v395
      %v413 = vlaneseq
      %v414 = vshrl.u32 %v413, 7
      %v415 = vsub.s32 0, %v414
      %v416 = vrot.slane %v412, %v415
      %v417 = vmul.f32 %v302, %v416
      %vm418 = vcmask 31744
      %v419 = vsel %vm418, %v417, 0.0
      %420 = vadd.xlane.f32.xlu0 %v419
      %v421 = vpop.xlane.xlu0 %420
      %v422 = vadd.f32 %v421, 1e-05
      %v423 = vrsqrt.pop %v422
      %425 = vrot.lane.b32.xlu0 %v417, 124
      %v426 = vpop.permute.xlu0 %425
      %vm428 = vcmask 64512
      %v429 = vsel %vm428, %v426, 0.0
      %430 = vadd.xlane.f32.xlu0 %v429
      %v431 = vpop.xlane.xlu0 %430
      %v432 = vadd.f32 %v431, 1e-05
      %v433 = vrsqrt.pop %v432
      %v436 = vunpack.c.l.s4 839922192
      %v437 = vunpack.c.0.s8 %v436
      %v438 = vlaneseq
      %v439 = vshrl.u32 %v438, 7
      %v440 = vsub.s32 %v437, %v439
      %v441 = vrot.slane %v407, %v440
      %v443 = vmul.f32 %v293, %v441
      %v445 = vcombine.high %v443, %v443
      %447 = vrot.lane.b32.xlu0 %v443, 17
      %v448 = vpop.permute.xlu0 %447
      %449 = vrot.lane.b32.xlu0 %v445, 17
      %v450 = vpop.permute.xlu0 %449
      %v451 = vlaneseq
      %v452 = vand.u32 %v451, 127
      %vm453 = vcmp.lt.s32.totalorder %v452, 17
      %v454 = vsel %vm453, %v448, %v450
      %v455 = vsel %vm453, %v450, %v448
      %v457 = vlaneseq
      %v458 = vshrl.u32 %v457, 7
      %v459 = vsub.s32 0, %v458
      %v460 = vrot.slane %v303, %v459
      %v461 = vlaneseq
      %v462 = vshrl.u32 %v461, 7
      %v463 = vsub.s32 1, %v462
      %v464 = vrot.slane %v303, %v463
      %v467 = vmul.f32 %v455, %v460
      %v468 = vmul.f32 %v454, %v464
      %469 = vrot.lane.b32.xlu0 %v443, 16
      %v470 = vpop.permute.xlu0 %469
      %471 = vrot.lane.b32.xlu0 %v445, 16
      %v472 = vpop.permute.xlu0 %471
      %vm473 = vcmp.lt.s32.totalorder %v452, 16
      %v474 = vsel %vm473, %v470, %v472
      %v475 = vsel %vm473, %v472, %v470
      %v477 = vlaneseq
      %v478 = vshrl.u32 %v477, 7
      %v479 = vsub.s32 0, %v478
      %v480 = vrot.slane %v304, %v479
      %v481 = vlaneseq
      %v482 = vshrl.u32 %v481, 7
      %v483 = vsub.s32 1, %v482
      %v484 = vrot.slane %v304, %v483
      %v487 = vmul.f32 %v475, %v480
      %v488 = vmul.f32 %v474, %v484
      %v490 = vsel %vm418, %v312, 0
      %vm492 = vcmask 1043456
      %v494 = vsel %vm492, %v487, 0
      %v497 = vsel %vm492, %v488, 0
      %499 = vmatprep.subr.mxu0 0.0
      %500 = vmatpush1.msra.mxu0 0.0
      %501 = vmatprep.subr.mxu0 0.0
      %502 = vmatpush1.msra.mxu0 0.0
      %503 = vmatprep.subr.mxu0 0.0
      %504 = vmatpush1.msra.mxu0 0.0
      %505 = vmatprep.subr.mxu0 0.0
      %506 = vmatpush1.msra.mxu0 0.0
      %507 = vmatprep.subr.mxu0 0.0
      %508 = vmatpush1.msra.mxu0 0.0
      %509 = vmatprep.subr.mxu0 0.0
      %510 = vmatpush1.msra.mxu0 0.0
      %511 = vmatprep.subr.mxu0 0.0
      %512 = vmatpush1.msra.mxu0 0.0
      %513 = vmatprep.subr.mxu0 0.0
      %514 = vmatpush1.msra.mxu0 0.0
      %515 = vmatprep.subr.mxu0 0.0
      %516 = vmatpush1.msra.mxu0 0.0
      %517 = vmatprep.subr.mxu0 0.0
      %518 = vmatpush1.msra.mxu0 0.0
      %519 = vmatprep.subr.mxu0 0.0
      %520 = vmatpush1.msra.mxu0 0.0
      %521 = vmatprep.subr.mxu0 0.0
      %522 = vmatpush1.msra.mxu0 0.0
      %523 = vmatprep.subr.mxu0 0.0
      %524 = vmatpush1.msra.mxu0 0.0
      %525 = vmatprep.subr.mxu0 0.0
      %526 = vmatpush1.msra.mxu0 0.0
      %527 = vmatprep.subr.mxu0 0.0
      %528 = vmatpush1.msra.mxu0 0.0
      %529 = vmatprep.subr.mxu0 %v497
      %530 = vmatpush1.msra.mxu0 %v494
      %531 = vmatprep.subr.mxu0 0.0
      %532 = vmatpush2.msra.mxu0 0.0
      %533 = vmatprep.subr.mxu0 0.0
      %534 = vmatpush2.msra.mxu0 0.0
      %535 = vmatprep.subr.mxu0 0.0
      %536 = vmatpush2.msra.mxu0 0.0
      %537 = vmatprep.subr.mxu0 0.0
      %538 = vmatpush2.msra.mxu0 0.0
      %539 = vmatprep.subr.mxu0 0.0
      %540 = vmatpush2.msra.mxu0 0.0
      %541 = vmatprep.subr.mxu0 0.0
      %542 = vmatpush2.msra.mxu0 0.0
      %543 = vmatprep.subr.mxu0 0.0
      %544 = vmatpush2.msra.mxu0 0.0
      %545 = vmatprep.subr.mxu0 0.0
      %546 = vmatpush2.msra.mxu0 0.0
      %547 = vmatprep.subr.mxu0 0.0
      %548 = vmatpush2.msra.mxu0 0.0
      %549 = vmatprep.subr.mxu0 0.0
      %550 = vmatpush2.msra.mxu0 0.0
      %551 = vmatprep.subr.mxu0 0.0
      %552 = vmatpush2.msra.mxu0 0.0
      %553 = vmatprep.subr.mxu0 0.0
      %554 = vmatpush2.msra.mxu0 0.0
      %555 = vmatprep.subr.mxu0 0.0
      %556 = vmatpush2.msra.mxu0 0.0
      %557 = vmatprep.subr.mxu0 0.0
      %558 = vmatpush2.msra.mxu0 0.0
      %559 = vmatprep.subr.mxu0 0.0
      %560 = vmatpush2.msra.mxu0 0.0
      %561 = vmatprep.subr.mxu0 0.0
      %562 = vmatpush2.msra.mxu0 0.0
      %563 = vmatprep.mubr.f32.mxu0 0.0
      %564 = vmatmul.mubr.f32.gmra.mxu0 %v490
      %v565 = vpop.f32.mrf.mxu0
      %v566 = vadd.f32 0.0, %v565
      %v567 = vpop.f32.mrf.mxu0
      %v568 = vadd.f32 0.0, %v567
      %569 = vdwg.mxu0
      %v571 = vsel %vm418, %v311, 0
      %v574 = vsel %vm492, %v467, 0
      %v577 = vsel %vm492, %v468, 0
      %579 = vmatprep.subr.mxu0 0.0
      %580 = vmatpush1.msra.mxu0 0.0
      %581 = vmatprep.subr.mxu0 0.0
      %582 = vmatpush1.msra.mxu0 0.0
      %583 = vmatprep.subr.mxu0 0.0
      %584 = vmatpush1.msra.mxu0 0.0
      %585 = vmatprep.subr.mxu0 0.0
      %586 = vmatpush1.msra.mxu0 0.0
      %587 = vmatprep.subr.mxu0 0.0
      %588 = vmatpush1.msra.mxu0 0.0
      %589 = vmatprep.subr.mxu0 0.0
      %590 = vmatpush1.msra.mxu0 0.0
      %591 = vmatprep.subr.mxu0 0.0
      %592 = vmatpush1.msra.mxu0 0.0
      %593 = vmatprep.subr.mxu0 0.0
      %594 = vmatpush1.msra.mxu0 0.0
      %595 = vmatprep.subr.mxu0 0.0
      %596 = vmatpush1.msra.mxu0 0.0
      %597 = vmatprep.subr.mxu0 0.0
      %598 = vmatpush1.msra.mxu0 0.0
      %599 = vmatprep.subr.mxu0 0.0
      %600 = vmatpush1.msra.mxu0 0.0
      %601 = vmatprep.subr.mxu0 0.0
      %602 = vmatpush1.msra.mxu0 0.0
      %603 = vmatprep.subr.mxu0 0.0
      %604 = vmatpush1.msra.mxu0 0.0
      %605 = vmatprep.subr.mxu0 0.0
      %606 = vmatpush1.msra.mxu0 0.0
      %607 = vmatprep.subr.mxu0 0.0
      %608 = vmatpush1.msra.mxu0 0.0
      %609 = vmatprep.subr.mxu0 %v577
      %610 = vmatpush1.msra.mxu0 %v574
      %611 = vmatprep.subr.mxu0 0.0
      %612 = vmatpush2.msra.mxu0 0.0
      %613 = vmatprep.subr.mxu0 0.0
      %614 = vmatpush2.msra.mxu0 0.0
      %615 = vmatprep.subr.mxu0 0.0
      %616 = vmatpush2.msra.mxu0 0.0
      %617 = vmatprep.subr.mxu0 0.0
      %618 = vmatpush2.msra.mxu0 0.0
      %619 = vmatprep.subr.mxu0 0.0
      %620 = vmatpush2.msra.mxu0 0.0
      %621 = vmatprep.subr.mxu0 0.0
      %622 = vmatpush2.msra.mxu0 0.0
      %623 = vmatprep.subr.mxu0 0.0
      %624 = vmatpush2.msra.mxu0 0.0
      %625 = vmatprep.subr.mxu0 0.0
      %626 = vmatpush2.msra.mxu0 0.0
      %627 = vmatprep.subr.mxu0 0.0
      %628 = vmatpush2.msra.mxu0 0.0
      %629 = vmatprep.subr.mxu0 0.0
      %630 = vmatpush2.msra.mxu0 0.0
      %631 = vmatprep.subr.mxu0 0.0
      %632 = vmatpush2.msra.mxu0 0.0
      %633 = vmatprep.subr.mxu0 0.0
      %634 = vmatpush2.msra.mxu0 0.0
      %635 = vmatprep.subr.mxu0 0.0
      %636 = vmatpush2.msra.mxu0 0.0
      %637 = vmatprep.subr.mxu0 0.0
      %638 = vmatpush2.msra.mxu0 0.0
      %639 = vmatprep.subr.mxu0 0.0
      %640 = vmatpush2.msra.mxu0 0.0
      %641 = vmatprep.subr.mxu0 0.0
      %642 = vmatpush2.msra.mxu0 0.0
      %643 = vmatprep.mubr.f32.mxu0 0.0
      %644 = vmatmul.mubr.f32.gmra.mxu0 %v571
      %v645 = vpop.f32.mrf.mxu0
      %v646 = vadd.f32 %v566, %v645
      %v647 = vpop.f32.mrf.mxu0
      %v648 = vadd.f32 %v568, %v647
      %649 = vdwg.mxu0
      %650 = vrot.lane.b32.xlu0 %v443, 15
      %v651 = vpop.permute.xlu0 %650
      %652 = vrot.lane.b32.xlu0 %v445, 15
      %v653 = vpop.permute.xlu0 %652
      %vm654 = vcmp.lt.s32.totalorder %v452, 15
      %v655 = vsel %vm654, %v651, %v653
      %v656 = vsel %vm654, %v653, %v651
      %v658 = vlaneseq
      %v659 = vshrl.u32 %v658, 7
      %v660 = vsub.s32 0, %v659
      %v661 = vrot.slane %v305, %v660
      %v662 = vlaneseq
      %v663 = vshrl.u32 %v662, 7
      %v664 = vsub.s32 1, %v663
      %v665 = vrot.slane %v305, %v664
      %v668 = vmul.f32 %v656, %v661
      %v669 = vmul.f32 %v655, %v665
      %v671 = vsel %vm418, %v313, 0
      %v674 = vsel %vm492, %v668, 0
      %v677 = vsel %vm492, %v669, 0
      %679 = vmatprep.subr.mxu0 0.0
      %680 = vmatpush1.msra.mxu0 0.0
      %681 = vmatprep.subr.mxu0 0.0
      %682 = vmatpush1.msra.mxu0 0.0
      %683 = vmatprep.subr.mxu0 0.0
      %684 = vmatpush1.msra.mxu0 0.0
      %685 = vmatprep.subr.mxu0 0.0
      %686 = vmatpush1.msra.mxu0 0.0
      %687 = vmatprep.subr.mxu0 0.0
      %688 = vmatpush1.msra.mxu0 0.0
      %689 = vmatprep.subr.mxu0 0.0
      %690 = vmatpush1.msra.mxu0 0.0
      %691 = vmatprep.subr.mxu0 0.0
      %692 = vmatpush1.msra.mxu0 0.0
      %693 = vmatprep.subr.mxu0 0.0
      %694 = vmatpush1.msra.mxu0 0.0
      %695 = vmatprep.subr.mxu0 0.0
      %696 = vmatpush1.msra.mxu0 0.0
      %697 = vmatprep.subr.mxu0 0.0
      %698 = vmatpush1.msra.mxu0 0.0
      %699 = vmatprep.subr.mxu0 0.0
      %700 = vmatpush1.msra.mxu0 0.0
      %701 = vmatprep.subr.mxu0 0.0
      %702 = vmatpush1.msra.mxu0 0.0
      %703 = vmatprep.subr.mxu0 0.0
      %704 = vmatpush1.msra.mxu0 0.0
      %705 = vmatprep.subr.mxu0 0.0
      %706 = vmatpush1.msra.mxu0 0.0
      %707 = vmatprep.subr.mxu0 0.0
      %708 = vmatpush1.msra.mxu0 0.0
      %709 = vmatprep.subr.mxu0 %v677
      %710 = vmatpush1.msra.mxu0 %v674
      %711 = vmatprep.subr.mxu0 0.0
      %712 = vmatpush2.msra.mxu0 0.0
      %713 = vmatprep.subr.mxu0 0.0
      %714 = vmatpush2.msra.mxu0 0.0
      %715 = vmatprep.subr.mxu0 0.0
      %716 = vmatpush2.msra.mxu0 0.0
      %717 = vmatprep.subr.mxu0 0.0
      %718 = vmatpush2.msra.mxu0 0.0
      %719 = vmatprep.subr.mxu0 0.0
      %720 = vmatpush2.msra.mxu0 0.0
      %721 = vmatprep.subr.mxu0 0.0
      %722 = vmatpush2.msra.mxu0 0.0
      %723 = vmatprep.subr.mxu0 0.0
      %724 = vmatpush2.msra.mxu0 0.0
      %725 = vmatprep.subr.mxu0 0.0
      %726 = vmatpush2.msra.mxu0 0.0
      %727 = vmatprep.subr.mxu0 0.0
      %728 = vmatpush2.msra.mxu0 0.0
      %729 = vmatprep.subr.mxu0 0.0
      %730 = vmatpush2.msra.mxu0 0.0
      %731 = vmatprep.subr.mxu0 0.0
      %732 = vmatpush2.msra.mxu0 0.0
      %733 = vmatprep.subr.mxu0 0.0
      %734 = vmatpush2.msra.mxu0 0.0
      %735 = vmatprep.subr.mxu0 0.0
      %736 = vmatpush2.msra.mxu0 0.0
      %737 = vmatprep.subr.mxu0 0.0
      %738 = vmatpush2.msra.mxu0 0.0
      %739 = vmatprep.subr.mxu0 0.0
      %740 = vmatpush2.msra.mxu0 0.0
      %741 = vmatprep.subr.mxu0 0.0
      %742 = vmatpush2.msra.mxu0 0.0
      %743 = vmatprep.mubr.f32.mxu0 0.0
      %744 = vmatmul.mubr.f32.gmra.mxu0 %v671
      %v745 = vpop.f32.mrf.mxu0
      %v746 = vadd.f32 0.0, %v745
      %v747 = vpop.f32.mrf.mxu0
      %v748 = vadd.f32 0.0, %v747
      %749 = vdwg.mxu0
      %v750 = vadd.f32 %v646, %v746
      %v751 = vadd.f32 %v648, %v748
      %752 = vrot.lane.b32.xlu0 %v443, 1
      %v753 = vpop.permute.xlu0 %752
      %754 = vrot.lane.b32.xlu0 %v445, 1
      %v755 = vpop.permute.xlu0 %754
      %vm756 = vcmp.lt.s32.totalorder %v452, 1
      %v757 = vsel %vm756, %v753, %v755
      %v758 = vsel %vm756, %v755, %v753
      %v760 = vlaneseq
      %v761 = vshrl.u32 %v760, 7
      %v762 = vsub.s32 0, %v761
      %v763 = vrot.slane %v306, %v762
      %v764 = vlaneseq
      %v765 = vshrl.u32 %v764, 7
      %v766 = vsub.s32 1, %v765
      %v767 = vrot.slane %v306, %v766
      %v770 = vmul.f32 %v758, %v763
      %v771 = vmul.f32 %v757, %v767
      %v773 = vsel %vm418, %v314, 0
      %v776 = vsel %vm492, %v770, 0
      %v779 = vsel %vm492, %v771, 0
      %781 = vmatprep.subr.mxu0 0.0
      %782 = vmatpush1.msra.mxu0 0.0
      %783 = vmatprep.subr.mxu0 0.0
      %784 = vmatpush1.msra.mxu0 0.0
      %785 = vmatprep.subr.mxu0 0.0
      %786 = vmatpush1.msra.mxu0 0.0
      %787 = vmatprep.subr.mxu0 0.0
      %788 = vmatpush1.msra.mxu0 0.0
      %789 = vmatprep.subr.mxu0 0.0
      %790 = vmatpush1.msra.mxu0 0.0
      %791 = vmatprep.subr.mxu0 0.0
      %792 = vmatpush1.msra.mxu0 0.0
      %793 = vmatprep.subr.mxu0 0.0
      %794 = vmatpush1.msra.mxu0 0.0
      %795 = vmatprep.subr.mxu0 0.0
      %796 = vmatpush1.msra.mxu0 0.0
      %797 = vmatprep.subr.mxu0 0.0
      %798 = vmatpush1.msra.mxu0 0.0
      %799 = vmatprep.subr.mxu0 0.0
      %800 = vmatpush1.msra.mxu0 0.0
      %801 = vmatprep.subr.mxu0 0.0
      %802 = vmatpush1.msra.mxu0 0.0
      %803 = vmatprep.subr.mxu0 0.0
      %804 = vmatpush1.msra.mxu0 0.0
      %805 = vmatprep.subr.mxu0 0.0
      %806 = vmatpush1.msra.mxu0 0.0
      %807 = vmatprep.subr.mxu0 0.0
      %808 = vmatpush1.msra.mxu0 0.0
      %809 = vmatprep.subr.mxu0 0.0
      %810 = vmatpush1.msra.mxu0 0.0
      %811 = vmatprep.subr.mxu0 %v779
      %812 = vmatpush1.msra.mxu0 %v776
      %813 = vmatprep.subr.mxu0 0.0
      %814 = vmatpush2.msra.mxu0 0.0
      %815 = vmatprep.subr.mxu0 0.0
      %816 = vmatpush2.msra.mxu0 0.0
      %817 = vmatprep.subr.mxu0 0.0
      %818 = vmatpush2.msra.mxu0 0.0
      %819 = vmatprep.subr.mxu0 0.0
      %820 = vmatpush2.msra.mxu0 0.0
      %821 = vmatprep.subr.mxu0 0.0
      %822 = vmatpush2.msra.mxu0 0.0
      %823 = vmatprep.subr.mxu0 0.0
      %824 = vmatpush2.msra.mxu0 0.0
      %825 = vmatprep.subr.mxu0 0.0
      %826 = vmatpush2.msra.mxu0 0.0
      %827 = vmatprep.subr.mxu0 0.0
      %828 = vmatpush2.msra.mxu0 0.0
      %829 = vmatprep.subr.mxu0 0.0
      %830 = vmatpush2.msra.mxu0 0.0
      %831 = vmatprep.subr.mxu0 0.0
      %832 = vmatpush2.msra.mxu0 0.0
      %833 = vmatprep.subr.mxu0 0.0
      %834 = vmatpush2.msra.mxu0 0.0
      %835 = vmatprep.subr.mxu0 0.0
      %836 = vmatpush2.msra.mxu0 0.0
      %837 = vmatprep.subr.mxu0 0.0
      %838 = vmatpush2.msra.mxu0 0.0
      %839 = vmatprep.subr.mxu0 0.0
      %840 = vmatpush2.msra.mxu0 0.0
      %841 = vmatprep.subr.mxu0 0.0
      %842 = vmatpush2.msra.mxu0 0.0
      %843 = vmatprep.subr.mxu0 0.0
      %844 = vmatpush2.msra.mxu0 0.0
      %845 = vmatprep.mubr.f32.mxu0 0.0
      %846 = vmatmul.mubr.f32.gmra.mxu0 %v773
      %v847 = vpop.f32.mrf.mxu0
      %v848 = vadd.f32 0.0, %v847
      %v849 = vpop.f32.mrf.mxu0
      %v850 = vadd.f32 0.0, %v849
      %851 = vdwg.mxu0
      %v852 = vadd.f32 %v750, %v848
      %v853 = vadd.f32 %v751, %v850
      %v855 = vsel %vm418, %v315, 0
      %v857 = vsel %vm492, %v443, 0
      %v859 = vsel %vm492, %v445, 0
      %861 = vmatprep.subr.mxu0 0.0
      %862 = vmatpush1.msra.mxu0 0.0
      %863 = vmatprep.subr.mxu0 0.0
      %864 = vmatpush1.msra.mxu0 0.0
      %865 = vmatprep.subr.mxu0 0.0
      %866 = vmatpush1.msra.mxu0 0.0
      %867 = vmatprep.subr.mxu0 0.0
      %868 = vmatpush1.msra.mxu0 0.0
      %869 = vmatprep.subr.mxu0 0.0
      %870 = vmatpush1.msra.mxu0 0.0
      %871 = vmatprep.subr.mxu0 0.0
      %872 = vmatpush1.msra.mxu0 0.0
      %873 = vmatprep.subr.mxu0 0.0
      %874 = vmatpush1.msra.mxu0 0.0
      %875 = vmatprep.subr.mxu0 0.0
      %876 = vmatpush1.msra.mxu0 0.0
      %877 = vmatprep.subr.mxu0 0.0
      %878 = vmatpush1.msra.mxu0 0.0
      %879 = vmatprep.subr.mxu0 0.0
      %880 = vmatpush1.msra.mxu0 0.0
      %881 = vmatprep.subr.mxu0 0.0
      %882 = vmatpush1.msra.mxu0 0.0
      %883 = vmatprep.subr.mxu0 0.0
      %884 = vmatpush1.msra.mxu0 0.0
      %885 = vmatprep.subr.mxu0 0.0
      %886 = vmatpush1.msra.mxu0 0.0
      %887 = vmatprep.subr.mxu0 0.0
      %888 = vmatpush1.msra.mxu0 0.0
      %889 = vmatprep.subr.mxu0 0.0
      %890 = vmatpush1.msra.mxu0 0.0
      %891 = vmatprep.subr.mxu0 %v859
      %892 = vmatpush1.msra.mxu0 %v857
      %893 = vmatprep.subr.mxu0 0.0
      %894 = vmatpush2.msra.mxu0 0.0
      %895 = vmatprep.subr.mxu0 0.0
      %896 = vmatpush2.msra.mxu0 0.0
      %897 = vmatprep.subr.mxu0 0.0
      %898 = vmatpush2.msra.mxu0 0.0
      %899 = vmatprep.subr.mxu0 0.0
      %900 = vmatpush2.msra.mxu0 0.0
      %901 = vmatprep.subr.mxu0 0.0
      %902 = vmatpush2.msra.mxu0 0.0
      %903 = vmatprep.subr.mxu0 0.0
      %904 = vmatpush2.msra.mxu0 0.0
      %905 = vmatprep.subr.mxu0 0.0
      %906 = vmatpush2.msra.mxu0 0.0
      %907 = vmatprep.subr.mxu0 0.0
      %908 = vmatpush2.msra.mxu0 0.0
      %909 = vmatprep.subr.mxu0 0.0
      %910 = vmatpush2.msra.mxu0 0.0
      %911 = vmatprep.subr.mxu0 0.0
      %912 = vmatpush2.msra.mxu0 0.0
      %913 = vmatprep.subr.mxu0 0.0
      %914 = vmatpush2.msra.mxu0 0.0
      %915 = vmatprep.subr.mxu0 0.0
      %916 = vmatpush2.msra.mxu0 0.0
      %917 = vmatprep.subr.mxu0 0.0
      %918 = vmatpush2.msra.mxu0 0.0
      %919 = vmatprep.subr.mxu0 0.0
      %920 = vmatpush2.msra.mxu0 0.0
      %921 = vmatprep.subr.mxu0 0.0
      %922 = vmatpush2.msra.mxu0 0.0
      %923 = vmatprep.subr.mxu0 0.0
      %924 = vmatpush2.msra.mxu0 0.0
      %925 = vmatprep.mubr.f32.mxu0 0.0
      %926 = vmatmul.mubr.f32.gmra.mxu0 %v855
      %v927 = vpop.f32.mrf.mxu0
      %v928 = vadd.f32 0.0, %v927
      %v929 = vpop.f32.mrf.mxu0
      %v930 = vadd.f32 0.0, %v929
      %931 = vdwg.mxu0
      %v932 = vadd.f32 %v852, %v928
      %v933 = vadd.f32 %v853, %v930
      %934 = vrot.lane.b32.xlu0 %v443, 127
      %v935 = vpop.permute.xlu0 %934
      %936 = vrot.lane.b32.xlu0 %v445, 127
      %v937 = vpop.permute.xlu0 %936
      %vm938 = vcmp.lt.s32.totalorder %v452, 127
      %v939 = vsel %vm938, %v935, %v937
      %v940 = vsel %vm938, %v937, %v935
      %v942 = vlaneseq
      %v943 = vshrl.u32 %v942, 7
      %v944 = vsub.s32 0, %v943
      %v945 = vrot.slane %v307, %v944
      %v946 = vlaneseq
      %v947 = vshrl.u32 %v946, 7
      %v948 = vsub.s32 1, %v947
      %v949 = vrot.slane %v307, %v948
      %v952 = vmul.f32 %v939, %v945
      %v953 = vmul.f32 %v940, %v949
      %v955 = vsel %vm418, %v316, 0
      %v958 = vsel %vm492, %v952, 0
      %v961 = vsel %vm492, %v953, 0
      %963 = vmatprep.subr.mxu0 0.0
      %964 = vmatpush1.msra.mxu0 0.0
      %965 = vmatprep.subr.mxu0 0.0
      %966 = vmatpush1.msra.mxu0 0.0
      %967 = vmatprep.subr.mxu0 0.0
      %968 = vmatpush1.msra.mxu0 0.0
      %969 = vmatprep.subr.mxu0 0.0
      %970 = vmatpush1.msra.mxu0 0.0
      %971 = vmatprep.subr.mxu0 0.0
      %972 = vmatpush1.msra.mxu0 0.0
      %973 = vmatprep.subr.mxu0 0.0
      %974 = vmatpush1.msra.mxu0 0.0
      %975 = vmatprep.subr.mxu0 0.0
      %976 = vmatpush1.msra.mxu0 0.0
      %977 = vmatprep.subr.mxu0 0.0
      %978 = vmatpush1.msra.mxu0 0.0
      %979 = vmatprep.subr.mxu0 0.0
      %980 = vmatpush1.msra.mxu0 0.0
      %981 = vmatprep.subr.mxu0 0.0
      %982 = vmatpush1.msra.mxu0 0.0
      %983 = vmatprep.subr.mxu0 0.0
      %984 = vmatpush1.msra.mxu0 0.0
      %985 = vmatprep.subr.mxu0 0.0
      %986 = vmatpush1.msra.mxu0 0.0
      %987 = vmatprep.subr.mxu0 0.0
      %988 = vmatpush1.msra.mxu0 0.0
      %989 = vmatprep.subr.mxu0 0.0
      %990 = vmatpush1.msra.mxu0 0.0
      %991 = vmatprep.subr.mxu0 0.0
      %992 = vmatpush1.msra.mxu0 0.0
      %993 = vmatprep.subr.mxu0 %v961
      %994 = vmatpush1.msra.mxu0 %v958
      %995 = vmatprep.subr.mxu0 0.0
      %996 = vmatpush2.msra.mxu0 0.0
      %997 = vmatprep.subr.mxu0 0.0
      %998 = vmatpush2.msra.mxu0 0.0
      %999 = vmatprep.subr.mxu0 0.0
      %1000 = vmatpush2.msra.mxu0 0.0
      %1001 = vmatprep.subr.mxu0 0.0
      %1002 = vmatpush2.msra.mxu0 0.0
      %1003 = vmatprep.subr.mxu0 0.0
      %1004 = vmatpush2.msra.mxu0 0.0
      %1005 = vmatprep.subr.mxu0 0.0
      %1006 = vmatpush2.msra.mxu0 0.0
      %1007 = vmatprep.subr.mxu0 0.0
      %1008 = vmatpush2.msra.mxu0 0.0
      %1009 = vmatprep.subr.mxu0 0.0
      %1010 = vmatpush2.msra.mxu0 0.0
      %1011 = vmatprep.subr.mxu0 0.0
      %1012 = vmatpush2.msra.mxu0 0.0
      %1013 = vmatprep.subr.mxu0 0.0
      %1014 = vmatpush2.msra.mxu0 0.0
      %1015 = vmatprep.subr.mxu0 0.0
      %1016 = vmatpush2.msra.mxu0 0.0
      %1017 = vmatprep.subr.mxu0 0.0
      %1018 = vmatpush2.msra.mxu0 0.0
      %1019 = vmatprep.subr.mxu0 0.0
      %1020 = vmatpush2.msra.mxu0 0.0
      %1021 = vmatprep.subr.mxu0 0.0
      %1022 = vmatpush2.msra.mxu0 0.0
      %1023 = vmatprep.subr.mxu0 0.0
      %1024 = vmatpush2.msra.mxu0 0.0
      %1025 = vmatprep.subr.mxu0 0.0
      %1026 = vmatpush2.msra.mxu0 0.0
      %1027 = vmatprep.mubr.f32.mxu0 0.0
      %1028 = vmatmul.mubr.f32.gmra.mxu0 %v955
      %v1029 = vpop.f32.mrf.mxu0
      %v1030 = vadd.f32 0.0, %v1029
      %v1031 = vpop.f32.mrf.mxu0
      %v1032 = vadd.f32 0.0, %v1031
      %1033 = vdwg.mxu0
      %v1034 = vadd.f32 %v932, %v1030
      %v1035 = vadd.f32 %v933, %v1032
      %1036 = vrot.lane.b32.xlu0 %v443, 113
      %v1037 = vpop.permute.xlu0 %1036
      %1038 = vrot.lane.b32.xlu0 %v445, 113
      %v1039 = vpop.permute.xlu0 %1038
      %vm1040 = vcmp.lt.s32.totalorder %v452, 113
      %v1041 = vsel %vm1040, %v1037, %v1039
      %v1042 = vsel %vm1040, %v1039, %v1037
      %v1044 = vlaneseq
      %v1045 = vshrl.u32 %v1044, 7
      %v1046 = vsub.s32 0, %v1045
      %v1047 = vrot.slane %v308, %v1046
      %v1048 = vlaneseq
      %v1049 = vshrl.u32 %v1048, 7
      %v1050 = vsub.s32 1, %v1049
      %v1051 = vrot.slane %v308, %v1050
      %v1054 = vmul.f32 %v1041, %v1047
      %v1055 = vmul.f32 %v1042, %v1051
      %v1057 = vsel %vm418, %v317, 0
      %v1060 = vsel %vm492, %v1054, 0
      %v1063 = vsel %vm492, %v1055, 0
      %1065 = vmatprep.subr.mxu0 0.0
      %1066 = vmatpush1.msra.mxu0 0.0
      %1067 = vmatprep.subr.mxu0 0.0
      %1068 = vmatpush1.msra.mxu0 0.0
      %1069 = vmatprep.subr.mxu0 0.0
      %1070 = vmatpush1.msra.mxu0 0.0
      %1071 = vmatprep.subr.mxu0 0.0
      %1072 = vmatpush1.msra.mxu0 0.0
      %1073 = vmatprep.subr.mxu0 0.0
      %1074 = vmatpush1.msra.mxu0 0.0
      %1075 = vmatprep.subr.mxu0 0.0
      %1076 = vmatpush1.msra.mxu0 0.0
      %1077 = vmatprep.subr.mxu0 0.0
      %1078 = vmatpush1.msra.mxu0 0.0
      %1079 = vmatprep.subr.mxu0 0.0
      %1080 = vmatpush1.msra.mxu0 0.0
      %1081 = vmatprep.subr.mxu0 0.0
      %1082 = vmatpush1.msra.mxu0 0.0
      %1083 = vmatprep.subr.mxu0 0.0
      %1084 = vmatpush1.msra.mxu0 0.0
      %1085 = vmatprep.subr.mxu0 0.0
      %1086 = vmatpush1.msra.mxu0 0.0
      %1087 = vmatprep.subr.mxu0 0.0
      %1088 = vmatpush1.msra.mxu0 0.0
      %1089 = vmatprep.subr.mxu0 0.0
      %1090 = vmatpush1.msra.mxu0 0.0
      %1091 = vmatprep.subr.mxu0 0.0
      %1092 = vmatpush1.msra.mxu0 0.0
      %1093 = vmatprep.subr.mxu0 0.0
      %1094 = vmatpush1.msra.mxu0 0.0
      %1095 = vmatprep.subr.mxu0 %v1063
      %1096 = vmatpush1.msra.mxu0 %v1060
      %1097 = vmatprep.subr.mxu0 0.0
      %1098 = vmatpush2.msra.mxu0 0.0
      %1099 = vmatprep.subr.mxu0 0.0
      %1100 = vmatpush2.msra.mxu0 0.0
      %1101 = vmatprep.subr.mxu0 0.0
      %1102 = vmatpush2.msra.mxu0 0.0
      %1103 = vmatprep.subr.mxu0 0.0
      %1104 = vmatpush2.msra.mxu0 0.0
      %1105 = vmatprep.subr.mxu0 0.0
      %1106 = vmatpush2.msra.mxu0 0.0
      %1107 = vmatprep.subr.mxu0 0.0
      %1108 = vmatpush2.msra.mxu0 0.0
      %1109 = vmatprep.subr.mxu0 0.0
      %1110 = vmatpush2.msra.mxu0 0.0
      %1111 = vmatprep.subr.mxu0 0.0
      %1112 = vmatpush2.msra.mxu0 0.0
      %1113 = vmatprep.subr.mxu0 0.0
      %1114 = vmatpush2.msra.mxu0 0.0
      %1115 = vmatprep.subr.mxu0 0.0
      %1116 = vmatpush2.msra.mxu0 0.0
      %1117 = vmatprep.subr.mxu0 0.0
      %1118 = vmatpush2.msra.mxu0 0.0
      %1119 = vmatprep.subr.mxu0 0.0
      %1120 = vmatpush2.msra.mxu0 0.0
      %1121 = vmatprep.subr.mxu0 0.0
      %1122 = vmatpush2.msra.mxu0 0.0
      %1123 = vmatprep.subr.mxu0 0.0
      %1124 = vmatpush2.msra.mxu0 0.0
      %1125 = vmatprep.subr.mxu0 0.0
      %1126 = vmatpush2.msra.mxu0 0.0
      %1127 = vmatprep.subr.mxu0 0.0
      %1128 = vmatpush2.msra.mxu0 0.0
      %1129 = vmatprep.mubr.f32.mxu0 0.0
      %1130 = vmatmul.mubr.f32.gmra.mxu0 %v1057
      %v1131 = vpop.f32.mrf.mxu0
      %v1132 = vadd.f32 0.0, %v1131
      %v1133 = vpop.f32.mrf.mxu0
      %v1134 = vadd.f32 0.0, %v1133
      %1135 = vdwg.mxu0
      %v1136 = vadd.f32 %v1034, %v1132
      %v1137 = vadd.f32 %v1035, %v1134
      %1138 = vrot.lane.b32.xlu0 %v443, 112
      %v1139 = vpop.permute.xlu0 %1138
      %1140 = vrot.lane.b32.xlu0 %v445, 112
      %v1141 = vpop.permute.xlu0 %1140
      %vm1142 = vcmp.lt.s32.totalorder %v452, 112
      %v1143 = vsel %vm1142, %v1139, %v1141
      %v1144 = vsel %vm1142, %v1141, %v1139
      %v1146 = vlaneseq
      %v1147 = vshrl.u32 %v1146, 7
      %v1148 = vsub.s32 0, %v1147
      %v1149 = vrot.slane %v309, %v1148
      %v1150 = vlaneseq
      %v1151 = vshrl.u32 %v1150, 7
      %v1152 = vsub.s32 1, %v1151
      %v1153 = vrot.slane %v309, %v1152
      %v1156 = vmul.f32 %v1143, %v1149
      %v1157 = vmul.f32 %v1144, %v1153
      %v1159 = vsel %vm418, %v318, 0
      %v1162 = vsel %vm492, %v1156, 0
      %v1165 = vsel %vm492, %v1157, 0
      %1167 = vmatprep.subr.mxu0 0.0
      %1168 = vmatpush1.msra.mxu0 0.0
      %1169 = vmatprep.subr.mxu0 0.0
      %1170 = vmatpush1.msra.mxu0 0.0
      %1171 = vmatprep.subr.mxu0 0.0
      %1172 = vmatpush1.msra.mxu0 0.0
      %1173 = vmatprep.subr.mxu0 0.0
      %1174 = vmatpush1.msra.mxu0 0.0
      %1175 = vmatprep.subr.mxu0 0.0
      %1176 = vmatpush1.msra.mxu0 0.0
      %1177 = vmatprep.subr.mxu0 0.0
      %1178 = vmatpush1.msra.mxu0 0.0
      %1179 = vmatprep.subr.mxu0 0.0
      %1180 = vmatpush1.msra.mxu0 0.0
      %1181 = vmatprep.subr.mxu0 0.0
      %1182 = vmatpush1.msra.mxu0 0.0
      %1183 = vmatprep.subr.mxu0 0.0
      %1184 = vmatpush1.msra.mxu0 0.0
      %1185 = vmatprep.subr.mxu0 0.0
      %1186 = vmatpush1.msra.mxu0 0.0
      %1187 = vmatprep.subr.mxu0 0.0
      %1188 = vmatpush1.msra.mxu0 0.0
      %1189 = vmatprep.subr.mxu0 0.0
      %1190 = vmatpush1.msra.mxu0 0.0
      %1191 = vmatprep.subr.mxu0 0.0
      %1192 = vmatpush1.msra.mxu0 0.0
      %1193 = vmatprep.subr.mxu0 0.0
      %1194 = vmatpush1.msra.mxu0 0.0
      %1195 = vmatprep.subr.mxu0 0.0
      %1196 = vmatpush1.msra.mxu0 0.0
      %1197 = vmatprep.subr.mxu0 %v1165
      %1198 = vmatpush1.msra.mxu0 %v1162
      %1199 = vmatprep.subr.mxu0 0.0
      %1200 = vmatpush2.msra.mxu0 0.0
      %1201 = vmatprep.subr.mxu0 0.0
      %1202 = vmatpush2.msra.mxu0 0.0
      %1203 = vmatprep.subr.mxu0 0.0
      %1204 = vmatpush2.msra.mxu0 0.0
      %1205 = vmatprep.subr.mxu0 0.0
      %1206 = vmatpush2.msra.mxu0 0.0
      %1207 = vmatprep.subr.mxu0 0.0
      %1208 = vmatpush2.msra.mxu0 0.0
      %1209 = vmatprep.subr.mxu0 0.0
      %1210 = vmatpush2.msra.mxu0 0.0
      %1211 = vmatprep.subr.mxu0 0.0
      %1212 = vmatpush2.msra.mxu0 0.0
      %1213 = vmatprep.subr.mxu0 0.0
      %1214 = vmatpush2.msra.mxu0 0.0
      %1215 = vmatprep.subr.mxu0 0.0
      %1216 = vmatpush2.msra.mxu0 0.0
      %1217 = vmatprep.subr.mxu0 0.0
      %1218 = vmatpush2.msra.mxu0 0.0
      %1219 = vmatprep.subr.mxu0 0.0
      %1220 = vmatpush2.msra.mxu0 0.0
      %1221 = vmatprep.subr.mxu0 0.0
      %1222 = vmatpush2.msra.mxu0 0.0
      %1223 = vmatprep.subr.mxu0 0.0
      %1224 = vmatpush2.msra.mxu0 0.0
      %1225 = vmatprep.subr.mxu0 0.0
      %1226 = vmatpush2.msra.mxu0 0.0
      %1227 = vmatprep.subr.mxu0 0.0
      %1228 = vmatpush2.msra.mxu0 0.0
      %1229 = vmatprep.subr.mxu0 0.0
      %1230 = vmatpush2.msra.mxu0 0.0
      %1231 = vmatprep.mubr.f32.mxu0 0.0
      %1232 = vmatmul.mubr.f32.gmra.mxu0 %v1159
      %v1233 = vpop.f32.mrf.mxu0
      %v1234 = vadd.f32 0.0, %v1233
      %v1235 = vpop.f32.mrf.mxu0
      %v1236 = vadd.f32 0.0, %v1235
      %1237 = vdwg.mxu0
      %v1238 = vadd.f32 %v1136, %v1234
      %v1239 = vadd.f32 %v1137, %v1236
      %1240 = vrot.lane.b32.xlu0 %v443, 111
      %v1241 = vpop.permute.xlu0 %1240
      %1242 = vrot.lane.b32.xlu0 %v445, 111
      %v1243 = vpop.permute.xlu0 %1242
      %vm1244 = vcmp.lt.s32.totalorder %v452, 111
      %v1245 = vsel %vm1244, %v1241, %v1243
      %v1246 = vsel %vm1244, %v1243, %v1241
      %v1248 = vlaneseq
      %v1249 = vshrl.u32 %v1248, 7
      %v1250 = vsub.s32 0, %v1249
      %v1251 = vrot.slane %v310, %v1250
      %v1252 = vlaneseq
      %v1253 = vshrl.u32 %v1252, 7
      %v1254 = vsub.s32 1, %v1253
      %v1255 = vrot.slane %v310, %v1254
      %v1258 = vmul.f32 %v1245, %v1251
      %v1259 = vmul.f32 %v1246, %v1255
      %v1261 = vsel %vm418, %v319, 0
      %v1264 = vsel %vm492, %v1258, 0
      %v1267 = vsel %vm492, %v1259, 0
      %1269 = vmatprep.subr.mxu0 0.0
      %1270 = vmatpush1.msra.mxu0 0.0
      %1271 = vmatprep.subr.mxu0 0.0
      %1272 = vmatpush1.msra.mxu0 0.0
      %1273 = vmatprep.subr.mxu0 0.0
      %1274 = vmatpush1.msra.mxu0 0.0
      %1275 = vmatprep.subr.mxu0 0.0
      %1276 = vmatpush1.msra.mxu0 0.0
      %1277 = vmatprep.subr.mxu0 0.0
      %1278 = vmatpush1.msra.mxu0 0.0
      %1279 = vmatprep.subr.mxu0 0.0
      %1280 = vmatpush1.msra.mxu0 0.0
      %1281 = vmatprep.subr.mxu0 0.0
      %1282 = vmatpush1.msra.mxu0 0.0
      %1283 = vmatprep.subr.mxu0 0.0
      %1284 = vmatpush1.msra.mxu0 0.0
      %1285 = vmatprep.subr.mxu0 0.0
      %1286 = vmatpush1.msra.mxu0 0.0
      %1287 = vmatprep.subr.mxu0 0.0
      %1288 = vmatpush1.msra.mxu0 0.0
      %1289 = vmatprep.subr.mxu0 0.0
      %1290 = vmatpush1.msra.mxu0 0.0
      %1291 = vmatprep.subr.mxu0 0.0
      %1292 = vmatpush1.msra.mxu0 0.0
      %1293 = vmatprep.subr.mxu0 0.0
      %1294 = vmatpush1.msra.mxu0 0.0
      %1295 = vmatprep.subr.mxu0 0.0
      %1296 = vmatpush1.msra.mxu0 0.0
      %1297 = vmatprep.subr.mxu0 0.0
      %1298 = vmatpush1.msra.mxu0 0.0
      %1299 = vmatprep.subr.mxu0 %v1267
      %1300 = vmatpush1.msra.mxu0 %v1264
      %1301 = vmatprep.subr.mxu0 0.0
      %1302 = vmatpush2.msra.mxu0 0.0
      %1303 = vmatprep.subr.mxu0 0.0
      %1304 = vmatpush2.msra.mxu0 0.0
      %1305 = vmatprep.subr.mxu0 0.0
      %1306 = vmatpush2.msra.mxu0 0.0
      %1307 = vmatprep.subr.mxu0 0.0
      %1308 = vmatpush2.msra.mxu0 0.0
      %1309 = vmatprep.subr.mxu0 0.0
      %1310 = vmatpush2.msra.mxu0 0.0
      %1311 = vmatprep.subr.mxu0 0.0
      %1312 = vmatpush2.msra.mxu0 0.0
      %1313 = vmatprep.subr.mxu0 0.0
      %1314 = vmatpush2.msra.mxu0 0.0
      %1315 = vmatprep.subr.mxu0 0.0
      %1316 = vmatpush2.msra.mxu0 0.0
      %1317 = vmatprep.subr.mxu0 0.0
      %1318 = vmatpush2.msra.mxu0 0.0
      %1319 = vmatprep.subr.mxu0 0.0
      %1320 = vmatpush2.msra.mxu0 0.0
      %1321 = vmatprep.subr.mxu0 0.0
      %1322 = vmatpush2.msra.mxu0 0.0
      %1323 = vmatprep.subr.mxu0 0.0
      %1324 = vmatpush2.msra.mxu0 0.0
      %1325 = vmatprep.subr.mxu0 0.0
      %1326 = vmatpush2.msra.mxu0 0.0
      %1327 = vmatprep.subr.mxu0 0.0
      %1328 = vmatpush2.msra.mxu0 0.0
      %1329 = vmatprep.subr.mxu0 0.0
      %1330 = vmatpush2.msra.mxu0 0.0
      %1331 = vmatprep.subr.mxu0 0.0
      %1332 = vmatpush2.msra.mxu0 0.0
      %1333 = vmatprep.mubr.f32.mxu0 0.0
      %1334 = vmatmul.mubr.f32.gmra.mxu0 %v1261
      %v1335 = vpop.f32.mrf.mxu0
      %v1336 = vadd.f32 0.0, %v1335
      %v1337 = vpop.f32.mrf.mxu0
      %v1338 = vadd.f32 0.0, %v1337
      %1339 = vdwg.mxu0
      %v1340 = vadd.f32 %v1238, %v1336
      %v1341 = vadd.f32 %v1239, %v1338
      %v1342 = vmul.f32 %v1340, %v423
      %v1343 = vmul.f32 %v1341, %v423
      %1345 = vset.pattern.permute.xlu0 12
      %1346 = vperm.xlu0 %1345, %v302
      %v1347 = vpop.permute.xlu0 %1346
      %v1349 = vadd.f32 %v1342, %v1347
      %v1350 = vadd.f32 %v1343, %v1347
      %vm1351 = vcmp.ge.f32.partialorder %v1349, 0.0
      %vm1352 = vcmp.ge.f32.partialorder %v1350, 0.0
      %v1353 = vmul.f32 %v1349, 0.2
      %v1354 = vmul.f32 %v1350, 0.2
      %v1355 = vsel %vm1351, %v1349, %v1353
      %v1356 = vsel %vm1352, %v1350, %v1354
      %v1357 = vmul.f32 %v1355, 1.4142135
      %v1358 = vmul.f32 %v1356, 1.4142135
      %v1360 = vrot.slane %v407, 4
      %v1361 = vrot.slane %v411, 4
      %v1362 = vsel %vm492, %v1360, %v1361
      %v1364 = vmul.f32 %v1357, %v1362
      %v1365 = vmul.f32 %v1358, %v1362
      %1366 = vrot.lane.b32.xlu0 %v1364, 17
      %v1367 = vpop.permute.xlu0 %1366
      %1368 = vrot.lane.b32.xlu0 %v1365, 17
      %v1369 = vpop.permute.xlu0 %1368
      %v1370 = vsel %vm453, %v1367, %v1369
      %v1371 = vsel %vm453, %v1369, %v1367
      %v1372 = vmul.f32 %v1371, %v460
      %v1373 = vmul.f32 %v1370, %v464
      %1374 = vrot.lane.b32.xlu0 %v1364, 16
      %v1375 = vpop.permute.xlu0 %1374
      %1376 = vrot.lane.b32.xlu0 %v1365, 16
      %v1377 = vpop.permute.xlu0 %1376
      %v1378 = vsel %vm473, %v1375, %v1377
      %v1379 = vsel %vm473, %v1377, %v1375
      %v1380 = vmul.f32 %v1379, %v480
      %v1381 = vmul.f32 %v1378, %v484
      %1382 = vrot.lane.b32.xlu0 %v312, 124
      %v1383 = vpop.permute.xlu0 %1382
      %v1384 = vsel %vm428, %v1383, 0
      %1386 = vmatprep.subr.mxu0 0.0
      %1387 = vmatpush1.msra.mxu0 0.0
      %1388 = vmatprep.subr.mxu0 0.0
      %1389 = vmatpush1.msra.mxu0 0.0
      %1390 = vmatprep.subr.mxu0 0.0
      %1391 = vmatpush1.msra.mxu0 0.0
      %1392 = vmatprep.subr.mxu0 0.0
      %1393 = vmatpush1.msra.mxu0 0.0
      %1394 = vmatprep.subr.mxu0 0.0
      %1395 = vmatpush1.msra.mxu0 0.0
      %1396 = vmatprep.subr.mxu0 0.0
      %1397 = vmatpush1.msra.mxu0 0.0
      %1398 = vmatprep.subr.mxu0 0.0
      %1399 = vmatpush1.msra.mxu0 0.0
      %1400 = vmatprep.subr.mxu0 0.0
      %1401 = vmatpush1.msra.mxu0 0.0
      %1402 = vmatprep.subr.mxu0 0.0
      %1403 = vmatpush1.msra.mxu0 0.0
      %1404 = vmatprep.subr.mxu0 0.0
      %1405 = vmatpush1.msra.mxu0 0.0
      %1406 = vmatprep.subr.mxu0 0.0
      %1407 = vmatpush1.msra.mxu0 0.0
      %1408 = vmatprep.subr.mxu0 0.0
      %1409 = vmatpush1.msra.mxu0 0.0
      %1410 = vmatprep.subr.mxu0 0.0
      %1411 = vmatpush1.msra.mxu0 0.0
      %1412 = vmatprep.subr.mxu0 0.0
      %1413 = vmatpush1.msra.mxu0 0.0
      %1414 = vmatprep.subr.mxu0 0.0
      %1415 = vmatpush1.msra.mxu0 0.0
      %1416 = vmatprep.subr.mxu0 %v1381
      %1417 = vmatpush1.msra.mxu0 %v1380
      %1418 = vmatprep.subr.mxu0 0.0
      %1419 = vmatpush2.msra.mxu0 0.0
      %1420 = vmatprep.subr.mxu0 0.0
      %1421 = vmatpush2.msra.mxu0 0.0
      %1422 = vmatprep.subr.mxu0 0.0
      %1423 = vmatpush2.msra.mxu0 0.0
      %1424 = vmatprep.subr.mxu0 0.0
      %1425 = vmatpush2.msra.mxu0 0.0
      %1426 = vmatprep.subr.mxu0 0.0
      %1427 = vmatpush2.msra.mxu0 0.0
      %1428 = vmatprep.subr.mxu0 0.0
      %1429 = vmatpush2.msra.mxu0 0.0
      %1430 = vmatprep.subr.mxu0 0.0
      %1431 = vmatpush2.msra.mxu0 0.0
      %1432 = vmatprep.subr.mxu0 0.0
      %1433 = vmatpush2.msra.mxu0 0.0
      %1434 = vmatprep.subr.mxu0 0.0
      %1435 = vmatpush2.msra.mxu0 0.0
      %1436 = vmatprep.subr.mxu0 0.0
      %1437 = vmatpush2.msra.mxu0 0.0
      %1438 = vmatprep.subr.mxu0 0.0
      %1439 = vmatpush2.msra.mxu0 0.0
      %1440 = vmatprep.subr.mxu0 0.0
      %1441 = vmatpush2.msra.mxu0 0.0
      %1442 = vmatprep.subr.mxu0 0.0
      %1443 = vmatpush2.msra.mxu0 0.0
      %1444 = vmatprep.subr.mxu0 0.0
      %1445 = vmatpush2.msra.mxu0 0.0
      %1446 = vmatprep.subr.mxu0 0.0
      %1447 = vmatpush2.msra.mxu0 0.0
      %1448 = vmatprep.subr.mxu0 0.0
      %1449 = vmatpush2.msra.mxu0 0.0
      %1450 = vmatprep.mubr.f32.mxu0 0.0
      %1451 = vmatmul.mubr.f32.gmra.mxu0 %v1384
      %v1452 = vpop.f32.mrf.mxu0
      %v1453 = vadd.f32 0.0, %v1452
      %v1454 = vpop.f32.mrf.mxu0
      %v1455 = vadd.f32 0.0, %v1454
      %1456 = vdwg.mxu0
      %1457 = vrot.lane.b32.xlu0 %v311, 124
      %v1458 = vpop.permute.xlu0 %1457
      %v1459 = vsel %vm428, %v1458, 0
      %1461 = vmatprep.subr.mxu0 0.0
      %1462 = vmatpush1.msra.mxu0 0.0
      %1463 = vmatprep.subr.mxu0 0.0
      %1464 = vmatpush1.msra.mxu0 0.0
      %1465 = vmatprep.subr.mxu0 0.0
      %1466 = vmatpush1.msra.mxu0 0.0
      %1467 = vmatprep.subr.mxu0 0.0
      %1468 = vmatpush1.msra.mxu0 0.0
      %1469 = vmatprep.subr.mxu0 0.0
      %1470 = vmatpush1.msra.mxu0 0.0
      %1471 = vmatprep.subr.mxu0 0.0
      %1472 = vmatpush1.msra.mxu0 0.0
      %1473 = vmatprep.subr.mxu0 0.0
      %1474 = vmatpush1.msra.mxu0 0.0
      %1475 = vmatprep.subr.mxu0 0.0
      %1476 = vmatpush1.msra.mxu0 0.0
      %1477 = vmatprep.subr.mxu0 0.0
      %1478 = vmatpush1.msra.mxu0 0.0
      %1479 = vmatprep.subr.mxu0 0.0
      %1480 = vmatpush1.msra.mxu0 0.0
      %1481 = vmatprep.subr.mxu0 0.0
      %1482 = vmatpush1.msra.mxu0 0.0
      %1483 = vmatprep.subr.mxu0 0.0
      %1484 = vmatpush1.msra.mxu0 0.0
      %1485 = vmatprep.subr.mxu0 0.0
      %1486 = vmatpush1.msra.mxu0 0.0
      %1487 = vmatprep.subr.mxu0 0.0
      %1488 = vmatpush1.msra.mxu0 0.0
      %1489 = vmatprep.subr.mxu0 0.0
      %1490 = vmatpush1.msra.mxu0 0.0
      %1491 = vmatprep.subr.mxu0 %v1373
      %1492 = vmatpush1.msra.mxu0 %v1372
      %1493 = vmatprep.subr.mxu0 0.0
      %1494 = vmatpush2.msra.mxu0 0.0
      %1495 = vmatprep.subr.mxu0 0.0
      %1496 = vmatpush2.msra.mxu0 0.0
      %1497 = vmatprep.subr.mxu0 0.0
      %1498 = vmatpush2.msra.mxu0 0.0
      %1499 = vmatprep.subr.mxu0 0.0
      %1500 = vmatpush2.msra.mxu0 0.0
      %1501 = vmatprep.subr.mxu0 0.0
      %1502 = vmatpush2.msra.mxu0 0.0
      %1503 = vmatprep.subr.mxu0 0.0
      %1504 = vmatpush2.msra.mxu0 0.0
      %1505 = vmatprep.subr.mxu0 0.0
      %1506 = vmatpush2.msra.mxu0 0.0
      %1507 = vmatprep.subr.mxu0 0.0
      %1508 = vmatpush2.msra.mxu0 0.0
      %1509 = vmatprep.subr.mxu0 0.0
      %1510 = vmatpush2.msra.mxu0 0.0
      %1511 = vmatprep.subr.mxu0 0.0
      %1512 = vmatpush2.msra.mxu0 0.0
      %1513 = vmatprep.subr.mxu0 0.0
      %1514 = vmatpush2.msra.mxu0 0.0
      %1515 = vmatprep.subr.mxu0 0.0
      %1516 = vmatpush2.msra.mxu0 0.0
      %1517 = vmatprep.subr.mxu0 0.0
      %1518 = vmatpush2.msra.mxu0 0.0
      %1519 = vmatprep.subr.mxu0 0.0
      %1520 = vmatpush2.msra.mxu0 0.0
      %1521 = vmatprep.subr.mxu0 0.0
      %1522 = vmatpush2.msra.mxu0 0.0
      %1523 = vmatprep.subr.mxu0 0.0
      %1524 = vmatpush2.msra.mxu0 0.0
      %1525 = vmatprep.mubr.f32.mxu0 0.0
      %1526 = vmatmul.mubr.f32.gmra.mxu0 %v1459
      %v1527 = vpop.f32.mrf.mxu0
      %v1528 = vadd.f32 %v1453, %v1527
      %v1529 = vpop.f32.mrf.mxu0
      %v1530 = vadd.f32 %v1455, %v1529
      %1531 = vdwg.mxu0
      %1532 = vrot.lane.b32.xlu0 %v1364, 15
      %v1533 = vpop.permute.xlu0 %1532
      %1534 = vrot.lane.b32.xlu0 %v1365, 15
      %v1535 = vpop.permute.xlu0 %1534
      %v1536 = vsel %vm654, %v1533, %v1535
      %v1537 = vsel %vm654, %v1535, %v1533
      %v1538 = vmul.f32 %v1537, %v661
      %v1539 = vmul.f32 %v1536, %v665
      %1540 = vrot.lane.b32.xlu0 %v313, 124
      %v1541 = vpop.permute.xlu0 %1540
      %v1542 = vsel %vm428, %v1541, 0
      %1544 = vmatprep.subr.mxu0 0.0
      %1545 = vmatpush1.msra.mxu0 0.0
      %1546 = vmatprep.subr.mxu0 0.0
      %1547 = vmatpush1.msra.mxu0 0.0
      %1548 = vmatprep.subr.mxu0 0.0
      %1549 = vmatpush1.msra.mxu0 0.0
      %1550 = vmatprep.subr.mxu0 0.0
      %1551 = vmatpush1.msra.mxu0 0.0
      %1552 = vmatprep.subr.mxu0 0.0
      %1553 = vmatpush1.msra.mxu0 0.0
      %1554 = vmatprep.subr.mxu0 0.0
      %1555 = vmatpush1.msra.mxu0 0.0
      %1556 = vmatprep.subr.mxu0 0.0
      %1557 = vmatpush1.msra.mxu0 0.0
      %1558 = vmatprep.subr.mxu0 0.0
      %1559 = vmatpush1.msra.mxu0 0.0
      %1560 = vmatprep.subr.mxu0 0.0
      %1561 = vmatpush1.msra.mxu0 0.0
      %1562 = vmatprep.subr.mxu0 0.0
      %1563 = vmatpush1.msra.mxu0 0.0
      %1564 = vmatprep.subr.mxu0 0.0
      %1565 = vmatpush1.msra.mxu0 0.0
      %1566 = vmatprep.subr.mxu0 0.0
      %1567 = vmatpush1.msra.mxu0 0.0
      %1568 = vmatprep.subr.mxu0 0.0
      %1569 = vmatpush1.msra.mxu0 0.0
      %1570 = vmatprep.subr.mxu0 0.0
      %1571 = vmatpush1.msra.mxu0 0.0
      %1572 = vmatprep.subr.mxu0 0.0
      %1573 = vmatpush1.msra.mxu0 0.0
      %1574 = vmatprep.subr.mxu0 %v1539
      %1575 = vmatpush1.msra.mxu0 %v1538
      %1576 = vmatprep.subr.mxu0 0.0
      %1577 = vmatpush2.msra.mxu0 0.0
      %1578 = vmatprep.subr.mxu0 0.0
      %1579 = vmatpush2.msra.mxu0 0.0
      %1580 = vmatprep.subr.mxu0 0.0
      %1581 = vmatpush2.msra.mxu0 0.0
      %1582 = vmatprep.subr.mxu0 0.0
      %1583 = vmatpush2.msra.mxu0 0.0
      %1584 = vmatprep.subr.mxu0 0.0
      %1585 = vmatpush2.msra.mxu0 0.0
      %1586 = vmatprep.subr.mxu0 0.0
      %1587 = vmatpush2.msra.mxu0 0.0
      %1588 = vmatprep.subr.mxu0 0.0
      %1589 = vmatpush2.msra.mxu0 0.0
      %1590 = vmatprep.subr.mxu0 0.0
      %1591 = vmatpush2.msra.mxu0 0.0
      %1592 = vmatprep.subr.mxu0 0.0
      %1593 = vmatpush2.msra.mxu0 0.0
      %1594 = vmatprep.subr.mxu0 0.0
      %1595 = vmatpush2.msra.mxu0 0.0
      %1596 = vmatprep.subr.mxu0 0.0
      %1597 = vmatpush2.msra.mxu0 0.0
      %1598 = vmatprep.subr.mxu0 0.0
      %1599 = vmatpush2.msra.mxu0 0.0
      %1600 = vmatprep.subr.mxu0 0.0
      %1601 = vmatpush2.msra.mxu0 0.0
      %1602 = vmatprep.subr.mxu0 0.0
      %1603 = vmatpush2.msra.mxu0 0.0
      %1604 = vmatprep.subr.mxu0 0.0
      %1605 = vmatpush2.msra.mxu0 0.0
      %1606 = vmatprep.subr.mxu0 0.0
      %1607 = vmatpush2.msra.mxu0 0.0
      %1608 = vmatprep.mubr.f32.mxu0 0.0
      %1609 = vmatmul.mubr.f32.gmra.mxu0 %v1542
      %v1610 = vpop.f32.mrf.mxu0
      %v1611 = vadd.f32 0.0, %v1610
      %v1612 = vpop.f32.mrf.mxu0
      %v1613 = vadd.f32 0.0, %v1612
      %1614 = vdwg.mxu0
      %v1615 = vadd.f32 %v1528, %v1611
      %v1616 = vadd.f32 %v1530, %v1613
      %1617 = vrot.lane.b32.xlu0 %v1364, 1
      %v1618 = vpop.permute.xlu0 %1617
      %1619 = vrot.lane.b32.xlu0 %v1365, 1
      %v1620 = vpop.permute.xlu0 %1619
      %v1621 = vsel %vm756, %v1618, %v1620
      %v1622 = vsel %vm756, %v1620, %v1618
      %v1623 = vmul.f32 %v1622, %v763
      %v1624 = vmul.f32 %v1621, %v767
      %1625 = vrot.lane.b32.xlu0 %v314, 124
      %v1626 = vpop.permute.xlu0 %1625
      %v1627 = vsel %vm428, %v1626, 0
      %1629 = vmatprep.subr.mxu0 0.0
      %1630 = vmatpush1.msra.mxu0 0.0
      %1631 = vmatprep.subr.mxu0 0.0
      %1632 = vmatpush1.msra.mxu0 0.0
      %1633 = vmatprep.subr.mxu0 0.0
      %1634 = vmatpush1.msra.mxu0 0.0
      %1635 = vmatprep.subr.mxu0 0.0
      %1636 = vmatpush1.msra.mxu0 0.0
      %1637 = vmatprep.subr.mxu0 0.0
      %1638 = vmatpush1.msra.mxu0 0.0
      %1639 = vmatprep.subr.mxu0 0.0
      %1640 = vmatpush1.msra.mxu0 0.0
      %1641 = vmatprep.subr.mxu0 0.0
      %1642 = vmatpush1.msra.mxu0 0.0
      %1643 = vmatprep.subr.mxu0 0.0
      %1644 = vmatpush1.msra.mxu0 0.0
      %1645 = vmatprep.subr.mxu0 0.0
      %1646 = vmatpush1.msra.mxu0 0.0
      %1647 = vmatprep.subr.mxu0 0.0
      %1648 = vmatpush1.msra.mxu0 0.0
      %1649 = vmatprep.subr.mxu0 0.0
      %1650 = vmatpush1.msra.mxu0 0.0
      %1651 = vmatprep.subr.mxu0 0.0
      %1652 = vmatpush1.msra.mxu0 0.0
      %1653 = vmatprep.subr.mxu0 0.0
      %1654 = vmatpush1.msra.mxu0 0.0
      %1655 = vmatprep.subr.mxu0 0.0
      %1656 = vmatpush1.msra.mxu0 0.0
      %1657 = vmatprep.subr.mxu0 0.0
      %1658 = vmatpush1.msra.mxu0 0.0
      %1659 = vmatprep.subr.mxu0 %v1624
      %1660 = vmatpush1.msra.mxu0 %v1623
      %1661 = vmatprep.subr.mxu0 0.0
      %1662 = vmatpush2.msra.mxu0 0.0
      %1663 = vmatprep.subr.mxu0 0.0
      %1664 = vmatpush2.msra.mxu0 0.0
      %1665 = vmatprep.subr.mxu0 0.0
      %1666 = vmatpush2.msra.mxu0 0.0
      %1667 = vmatprep.subr.mxu0 0.0
      %1668 = vmatpush2.msra.mxu0 0.0
      %1669 = vmatprep.subr.mxu0 0.0
      %1670 = vmatpush2.msra.mxu0 0.0
      %1671 = vmatprep.subr.mxu0 0.0
      %1672 = vmatpush2.msra.mxu0 0.0
      %1673 = vmatprep.subr.mxu0 0.0
      %1674 = vmatpush2.msra.mxu0 0.0
      %1675 = vmatprep.subr.mxu0 0.0
      %1676 = vmatpush2.msra.mxu0 0.0
      %1677 = vmatprep.subr.mxu0 0.0
      %1678 = vmatpush2.msra.mxu0 0.0
      %1679 = vmatprep.subr.mxu0 0.0
      %1680 = vmatpush2.msra.mxu0 0.0
      %1681 = vmatprep.subr.mxu0 0.0
      %1682 = vmatpush2.msra.mxu0 0.0
      %1683 = vmatprep.subr.mxu0 0.0
      %1684 = vmatpush2.msra.mxu0 0.0
      %1685 = vmatprep.subr.mxu0 0.0
      %1686 = vmatpush2.msra.mxu0 0.0
      %1687 = vmatprep.subr.mxu0 0.0
      %1688 = vmatpush2.msra.mxu0 0.0
      %1689 = vmatprep.subr.mxu0 0.0
      %1690 = vmatpush2.msra.mxu0 0.0
      %1691 = vmatprep.subr.mxu0 0.0
      %1692 = vmatpush2.msra.mxu0 0.0
      %1693 = vmatprep.mubr.f32.mxu0 0.0
      %1694 = vmatmul.mubr.f32.gmra.mxu0 %v1627
      %v1695 = vpop.f32.mrf.mxu0
      %v1696 = vadd.f32 0.0, %v1695
      %v1697 = vpop.f32.mrf.mxu0
      %v1698 = vadd.f32 0.0, %v1697
      %1699 = vdwg.mxu0
      %v1700 = vadd.f32 %v1615, %v1696
      %v1701 = vadd.f32 %v1616, %v1698
      %1702 = vrot.lane.b32.xlu0 %v315, 124
      %v1703 = vpop.permute.xlu0 %1702
      %v1704 = vsel %vm428, %v1703, 0
      %1706 = vmatprep.subr.mxu0 0.0
      %1707 = vmatpush1.msra.mxu0 0.0
      %1708 = vmatprep.subr.mxu0 0.0
      %1709 = vmatpush1.msra.mxu0 0.0
      %1710 = vmatprep.subr.mxu0 0.0
      %1711 = vmatpush1.msra.mxu0 0.0
      %1712 = vmatprep.subr.mxu0 0.0
      %1713 = vmatpush1.msra.mxu0 0.0
      %1714 = vmatprep.subr.mxu0 0.0
      %1715 = vmatpush1.msra.mxu0 0.0
      %1716 = vmatprep.subr.mxu0 0.0
      %1717 = vmatpush1.msra.mxu0 0.0
      %1718 = vmatprep.subr.mxu0 0.0
      %1719 = vmatpush1.msra.mxu0 0.0
      %1720 = vmatprep.subr.mxu0 0.0
      %1721 = vmatpush1.msra.mxu0 0.0
      %1722 = vmatprep.subr.mxu0 0.0
      %1723 = vmatpush1.msra.mxu0 0.0
      %1724 = vmatprep.subr.mxu0 0.0
      %1725 = vmatpush1.msra.mxu0 0.0
      %1726 = vmatprep.subr.mxu0 0.0
      %1727 = vmatpush1.msra.mxu0 0.0
      %1728 = vmatprep.subr.mxu0 0.0
      %1729 = vmatpush1.msra.mxu0 0.0
      %1730 = vmatprep.subr.mxu0 0.0
      %1731 = vmatpush1.msra.mxu0 0.0
      %1732 = vmatprep.subr.mxu0 0.0
      %1733 = vmatpush1.msra.mxu0 0.0
      %1734 = vmatprep.subr.mxu0 0.0
      %1735 = vmatpush1.msra.mxu0 0.0
      %1736 = vmatprep.subr.mxu0 %v1365
      %1737 = vmatpush1.msra.mxu0 %v1364
      %1738 = vmatprep.subr.mxu0 0.0
      %1739 = vmatpush2.msra.mxu0 0.0
      %1740 = vmatprep.subr.mxu0 0.0
      %1741 = vmatpush2.msra.mxu0 0.0
      %1742 = vmatprep.subr.mxu0 0.0
      %1743 = vmatpush2.msra.mxu0 0.0
      %1744 = vmatprep.subr.mxu0 0.0
      %1745 = vmatpush2.msra.mxu0 0.0
      %1746 = vmatprep.subr.mxu0 0.0
      %1747 = vmatpush2.msra.mxu0 0.0
      %1748 = vmatprep.subr.mxu0 0.0
      %1749 = vmatpush2.msra.mxu0 0.0
      %1750 = vmatprep.subr.mxu0 0.0
      %1751 = vmatpush2.msra.mxu0 0.0
      %1752 = vmatprep.subr.mxu0 0.0
      %1753 = vmatpush2.msra.mxu0 0.0
      %1754 = vmatprep.subr.mxu0 0.0
      %1755 = vmatpush2.msra.mxu0 0.0
      %1756 = vmatprep.subr.mxu0 0.0
      %1757 = vmatpush2.msra.mxu0 0.0
      %1758 = vmatprep.subr.mxu0 0.0
      %1759 = vmatpush2.msra.mxu0 0.0
      %1760 = vmatprep.subr.mxu0 0.0
      %1761 = vmatpush2.msra.mxu0 0.0
      %1762 = vmatprep.subr.mxu0 0.0
      %1763 = vmatpush2.msra.mxu0 0.0
      %1764 = vmatprep.subr.mxu0 0.0
      %1765 = vmatpush2.msra.mxu0 0.0
      %1766 = vmatprep.subr.mxu0 0.0
      %1767 = vmatpush2.msra.mxu0 0.0
      %1768 = vmatprep.subr.mxu0 0.0
      %1769 = vmatpush2.msra.mxu0 0.0
      %1770 = vmatprep.mubr.f32.mxu0 0.0
      %1771 = vmatmul.mubr.f32.gmra.mxu0 %v1704
      %v1772 = vpop.f32.mrf.mxu0
      %v1773 = vadd.f32 0.0, %v1772
      %v1774 = vpop.f32.mrf.mxu0
      %v1775 = vadd.f32 0.0, %v1774
      %1776 = vdwg.mxu0
      %v1777 = vadd.f32 %v1700, %v1773
      %v1778 = vadd.f32 %v1701, %v1775
      %1779 = vrot.lane.b32.xlu0 %v1364, 127
      %v1780 = vpop.permute.xlu0 %1779
      %1781 = vrot.lane.b32.xlu0 %v1365, 127
      %v1782 = vpop.permute.xlu0 %1781
      %v1783 = vsel %vm938, %v1780, %v1782
      %v1784 = vsel %vm938, %v1782, %v1780
      %v1785 = vmul.f32 %v1783, %v945
      %v1786 = vmul.f32 %v1784, %v949
      %1787 = vrot.lane.b32.xlu0 %v316, 124
      %v1788 = vpop.permute.xlu0 %1787
      %v1789 = vsel %vm428, %v1788, 0
      %1791 = vmatprep.subr.mxu0 0.0
      %1792 = vmatpush1.msra.mxu0 0.0
      %1793 = vmatprep.subr.mxu0 0.0
      %1794 = vmatpush1.msra.mxu0 0.0
      %1795 = vmatprep.subr.mxu0 0.0
      %1796 = vmatpush1.msra.mxu0 0.0
      %1797 = vmatprep.subr.mxu0 0.0
      %1798 = vmatpush1.msra.mxu0 0.0
      %1799 = vmatprep.subr.mxu0 0.0
      %1800 = vmatpush1.msra.mxu0 0.0
      %1801 = vmatprep.subr.mxu0 0.0
      %1802 = vmatpush1.msra.mxu0 0.0
      %1803 = vmatprep.subr.mxu0 0.0
      %1804 = vmatpush1.msra.mxu0 0.0
      %1805 = vmatprep.subr.mxu0 0.0
      %1806 = vmatpush1.msra.mxu0 0.0
      %1807 = vmatprep.subr.mxu0 0.0
      %1808 = vmatpush1.msra.mxu0 0.0
      %1809 = vmatprep.subr.mxu0 0.0
      %1810 = vmatpush1.msra.mxu0 0.0
      %1811 = vmatprep.subr.mxu0 0.0
      %1812 = vmatpush1.msra.mxu0 0.0
      %1813 = vmatprep.subr.mxu0 0.0
      %1814 = vmatpush1.msra.mxu0 0.0
      %1815 = vmatprep.subr.mxu0 0.0
      %1816 = vmatpush1.msra.mxu0 0.0
      %1817 = vmatprep.subr.mxu0 0.0
      %1818 = vmatpush1.msra.mxu0 0.0
      %1819 = vmatprep.subr.mxu0 0.0
      %1820 = vmatpush1.msra.mxu0 0.0
      %1821 = vmatprep.subr.mxu0 %v1786
      %1822 = vmatpush1.msra.mxu0 %v1785
      %1823 = vmatprep.subr.mxu0 0.0
      %1824 = vmatpush2.msra.mxu0 0.0
      %1825 = vmatprep.subr.mxu0 0.0
      %1826 = vmatpush2.msra.mxu0 0.0
      %1827 = vmatprep.subr.mxu0 0.0
      %1828 = vmatpush2.msra.mxu0 0.0
      %1829 = vmatprep.subr.mxu0 0.0
      %1830 = vmatpush2.msra.mxu0 0.0
      %1831 = vmatprep.subr.mxu0 0.0
      %1832 = vmatpush2.msra.mxu0 0.0
      %1833 = vmatprep.subr.mxu0 0.0
      %1834 = vmatpush2.msra.mxu0 0.0
      %1835 = vmatprep.subr.mxu0 0.0
      %1836 = vmatpush2.msra.mxu0 0.0
      %1837 = vmatprep.subr.mxu0 0.0
      %1838 = vmatpush2.msra.mxu0 0.0
      %1839 = vmatprep.subr.mxu0 0.0
      %1840 = vmatpush2.msra.mxu0 0.0
      %1841 = vmatprep.subr.mxu0 0.0
      %1842 = vmatpush2.msra.mxu0 0.0
      %1843 = vmatprep.subr.mxu0 0.0
      %1844 = vmatpush2.msra.mxu0 0.0
      %1845 = vmatprep.subr.mxu0 0.0
      %1846 = vmatpush2.msra.mxu0 0.0
      %1847 = vmatprep.subr.mxu0 0.0
      %1848 = vmatpush2.msra.mxu0 0.0
      %1849 = vmatprep.subr.mxu0 0.0
      %1850 = vmatpush2.msra.mxu0 0.0
      %1851 = vmatprep.subr.mxu0 0.0
      %1852 = vmatpush2.msra.mxu0 0.0
      %1853 = vmatprep.subr.mxu0 0.0
      %1854 = vmatpush2.msra.mxu0 0.0
      %1855 = vmatprep.mubr.f32.mxu0 0.0
      %1856 = vmatmul.mubr.f32.gmra.mxu0 %v1789
      %v1857 = vpop.f32.mrf.mxu0
      %v1858 = vadd.f32 0.0, %v1857
      %v1859 = vpop.f32.mrf.mxu0
      %v1860 = vadd.f32 0.0, %v1859
      %1861 = vdwg.mxu0
      %v1862 = vadd.f32 %v1777, %v1858
      %v1863 = vadd.f32 %v1778, %v1860
      %1864 = vrot.lane.b32.xlu0 %v1364, 113
      %v1865 = vpop.permute.xlu0 %1864
      %1866 = vrot.lane.b32.xlu0 %v1365, 113
      %v1867 = vpop.permute.xlu0 %1866
      %v1868 = vsel %vm1040, %v1865, %v1867
      %v1869 = vsel %vm1040, %v1867, %v1865
      %v1870 = vmul.f32 %v1868, %v1047
      %v1871 = vmul.f32 %v1869, %v1051
      %1872 = vrot.lane.b32.xlu0 %v317, 124
      %v1873 = vpop.permute.xlu0 %1872
      %v1874 = vsel %vm428, %v1873, 0
      %1876 = vmatprep.subr.mxu0 0.0
      %1877 = vmatpush1.msra.mxu0 0.0
      %1878 = vmatprep.subr.mxu0 0.0
      %1879 = vmatpush1.msra.mxu0 0.0
      %1880 = vmatprep.subr.mxu0 0.0
      %1881 = vmatpush1.msra.mxu0 0.0
      %1882 = vmatprep.subr.mxu0 0.0
      %1883 = vmatpush1.msra.mxu0 0.0
      %1884 = vmatprep.subr.mxu0 0.0
      %1885 = vmatpush1.msra.mxu0 0.0
      %1886 = vmatprep.subr.mxu0 0.0
      %1887 = vmatpush1.msra.mxu0 0.0
      %1888 = vmatprep.subr.mxu0 0.0
      %1889 = vmatpush1.msra.mxu0 0.0
      %1890 = vmatprep.subr.mxu0 0.0
      %1891 = vmatpush1.msra.mxu0 0.0
      %1892 = vmatprep.subr.mxu0 0.0
      %1893 = vmatpush1.msra.mxu0 0.0
      %1894 = vmatprep.subr.mxu0 0.0
      %1895 = vmatpush1.msra.mxu0 0.0
      %1896 = vmatprep.subr.mxu0 0.0
      %1897 = vmatpush1.msra.mxu0 0.0
      %1898 = vmatprep.subr.mxu0 0.0
      %1899 = vmatpush1.msra.mxu0 0.0
      %1900 = vmatprep.subr.mxu0 0.0
      %1901 = vmatpush1.msra.mxu0 0.0
      %1902 = vmatprep.subr.mxu0 0.0
      %1903 = vmatpush1.msra.mxu0 0.0
      %1904 = vmatprep.subr.mxu0 0.0
      %1905 = vmatpush1.msra.mxu0 0.0
      %1906 = vmatprep.subr.mxu0 %v1871
      %1907 = vmatpush1.msra.mxu0 %v1870
      %1908 = vmatprep.subr.mxu0 0.0
      %1909 = vmatpush2.msra.mxu0 0.0
      %1910 = vmatprep.subr.mxu0 0.0
      %1911 = vmatpush2.msra.mxu0 0.0
      %1912 = vmatprep.subr.mxu0 0.0
      %1913 = vmatpush2.msra.mxu0 0.0
      %1914 = vmatprep.subr.mxu0 0.0
      %1915 = vmatpush2.msra.mxu0 0.0
      %1916 = vmatprep.subr.mxu0 0.0
      %1917 = vmatpush2.msra.mxu0 0.0
      %1918 = vmatprep.subr.mxu0 0.0
      %1919 = vmatpush2.msra.mxu0 0.0
      %1920 = vmatprep.subr.mxu0 0.0
      %1921 = vmatpush2.msra.mxu0 0.0
      %1922 = vmatprep.subr.mxu0 0.0
      %1923 = vmatpush2.msra.mxu0 0.0
      %1924 = vmatprep.subr.mxu0 0.0
      %1925 = vmatpush2.msra.mxu0 0.0
      %1926 = vmatprep.subr.mxu0 0.0
      %1927 = vmatpush2.msra.mxu0 0.0
      %1928 = vmatprep.subr.mxu0 0.0
      %1929 = vmatpush2.msra.mxu0 0.0
      %1930 = vmatprep.subr.mxu0 0.0
      %1931 = vmatpush2.msra.mxu0 0.0
      %1932 = vmatprep.subr.mxu0 0.0
      %1933 = vmatpush2.msra.mxu0 0.0
      %1934 = vmatprep.subr.mxu0 0.0
      %1935 = vmatpush2.msra.mxu0 0.0
      %1936 = vmatprep.subr.mxu0 0.0
      %1937 = vmatpush2.msra.mxu0 0.0
      %1938 = vmatprep.subr.mxu0 0.0
      %1939 = vmatpush2.msra.mxu0 0.0
      %1940 = vmatprep.mubr.f32.mxu0 0.0
      %1941 = vmatmul.mubr.f32.gmra.mxu0 %v1874
      %v1942 = vpop.f32.mrf.mxu0
      %v1943 = vadd.f32 0.0, %v1942
      %v1944 = vpop.f32.mrf.mxu0
      %v1945 = vadd.f32 0.0, %v1944
      %1946 = vdwg.mxu0
      %v1947 = vadd.f32 %v1862, %v1943
      %v1948 = vadd.f32 %v1863, %v1945
      %1949 = vrot.lane.b32.xlu0 %v1364, 112
      %v1950 = vpop.permute.xlu0 %1949
      %1951 = vrot.lane.b32.xlu0 %v1365, 112
      %v1952 = vpop.permute.xlu0 %1951
      %v1953 = vsel %vm1142, %v1950, %v1952
      %v1954 = vsel %vm1142, %v1952, %v1950
      %v1955 = vmul.f32 %v1953, %v1149
      %v1956 = vmul.f32 %v1954, %v1153
      %1957 = vrot.lane.b32.xlu0 %v318, 124
      %v1958 = vpop.permute.xlu0 %1957
      %v1959 = vsel %vm428, %v1958, 0
      %1961 = vmatprep.subr.mxu0 0.0
      %1962 = vmatpush1.msra.mxu0 0.0
      %1963 = vmatprep.subr.mxu0 0.0
      %1964 = vmatpush1.msra.mxu0 0.0
      %1965 = vmatprep.subr.mxu0 0.0
      %1966 = vmatpush1.msra.mxu0 0.0
      %1967 = vmatprep.subr.mxu0 0.0
      %1968 = vmatpush1.msra.mxu0 0.0
      %1969 = vmatprep.subr.mxu0 0.0
      %1970 = vmatpush1.msra.mxu0 0.0
      %1971 = vmatprep.subr.mxu0 0.0
      %1972 = vmatpush1.msra.mxu0 0.0
      %1973 = vmatprep.subr.mxu0 0.0
      %1974 = vmatpush1.msra.mxu0 0.0
      %1975 = vmatprep.subr.mxu0 0.0
      %1976 = vmatpush1.msra.mxu0 0.0
      %1977 = vmatprep.subr.mxu0 0.0
      %1978 = vmatpush1.msra.mxu0 0.0
      %1979 = vmatprep.subr.mxu0 0.0
      %1980 = vmatpush1.msra.mxu0 0.0
      %1981 = vmatprep.subr.mxu0 0.0
      %1982 = vmatpush1.msra.mxu0 0.0
      %1983 = vmatprep.subr.mxu0 0.0
      %1984 = vmatpush1.msra.mxu0 0.0
      %1985 = vmatprep.subr.mxu0 0.0
      %1986 = vmatpush1.msra.mxu0 0.0
      %1987 = vmatprep.subr.mxu0 0.0
      %1988 = vmatpush1.msra.mxu0 0.0
      %1989 = vmatprep.subr.mxu0 0.0
      %1990 = vmatpush1.msra.mxu0 0.0
      %1991 = vmatprep.subr.mxu0 %v1956
      %1992 = vmatpush1.msra.mxu0 %v1955
      %1993 = vmatprep.subr.mxu0 0.0
      %1994 = vmatpush2.msra.mxu0 0.0
      %1995 = vmatprep.subr.mxu0 0.0
      %1996 = vmatpush2.msra.mxu0 0.0
      %1997 = vmatprep.subr.mxu0 0.0
      %1998 = vmatpush2.msra.mxu0 0.0
      %1999 = vmatprep.subr.mxu0 0.0
      %2000 = vmatpush2.msra.mxu0 0.0
      %2001 = vmatprep.subr.mxu0 0.0
      %2002 = vmatpush2.msra.mxu0 0.0
      %2003 = vmatprep.subr.mxu0 0.0
      %2004 = vmatpush2.msra.mxu0 0.0
      %2005 = vmatprep.subr.mxu0 0.0
      %2006 = vmatpush2.msra.mxu0 0.0
      %2007 = vmatprep.subr.mxu0 0.0
      %2008 = vmatpush2.msra.mxu0 0.0
      %2009 = vmatprep.subr.mxu0 0.0
      %2010 = vmatpush2.msra.mxu0 0.0
      %2011 = vmatprep.subr.mxu0 0.0
      %2012 = vmatpush2.msra.mxu0 0.0
      %2013 = vmatprep.subr.mxu0 0.0
      %2014 = vmatpush2.msra.mxu0 0.0
      %2015 = vmatprep.subr.mxu0 0.0
      %2016 = vmatpush2.msra.mxu0 0.0
      %2017 = vmatprep.subr.mxu0 0.0
      %2018 = vmatpush2.msra.mxu0 0.0
      %2019 = vmatprep.subr.mxu0 0.0
      %2020 = vmatpush2.msra.mxu0 0.0
      %2021 = vmatprep.subr.mxu0 0.0
      %2022 = vmatpush2.msra.mxu0 0.0
      %2023 = vmatprep.subr.mxu0 0.0
      %2024 = vmatpush2.msra.mxu0 0.0
      %2025 = vmatprep.mubr.f32.mxu0 0.0
      %2026 = vmatmul.mubr.f32.gmra.mxu0 %v1959
      %v2027 = vpop.f32.mrf.mxu0
      %v2028 = vadd.f32 0.0, %v2027
      %v2029 = vpop.f32.mrf.mxu0
      %v2030 = vadd.f32 0.0, %v2029
      %2031 = vdwg.mxu0
      %v2032 = vadd.f32 %v1947, %v2028
      %v2033 = vadd.f32 %v1948, %v2030
      %2034 = vrot.lane.b32.xlu0 %v1364, 111
      %v2035 = vpop.permute.xlu0 %2034
      %2036 = vrot.lane.b32.xlu0 %v1365, 111
      %v2037 = vpop.permute.xlu0 %2036
      %v2038 = vsel %vm1244, %v2035, %v2037
      %v2039 = vsel %vm1244, %v2037, %v2035
      %v2040 = vmul.f32 %v2038, %v1251
      %v2041 = vmul.f32 %v2039, %v1255
      %2042 = vrot.lane.b32.xlu0 %v319, 124
      %v2043 = vpop.permute.xlu0 %2042
      %v2044 = vsel %vm428, %v2043, 0
      %2046 = vmatprep.subr.mxu0 0.0
      %2047 = vmatpush1.msra.mxu0 0.0
      %2048 = vmatprep.subr.mxu0 0.0
      %2049 = vmatpush1.msra.mxu0 0.0
      %2050 = vmatprep.subr.mxu0 0.0
      %2051 = vmatpush1.msra.mxu0 0.0
      %2052 = vmatprep.subr.mxu0 0.0
      %2053 = vmatpush1.msra.mxu0 0.0
      %2054 = vmatprep.subr.mxu0 0.0
      %2055 = vmatpush1.msra.mxu0 0.0
      %2056 = vmatprep.subr.mxu0 0.0
      %2057 = vmatpush1.msra.mxu0 0.0
      %2058 = vmatprep.subr.mxu0 0.0
      %2059 = vmatpush1.msra.mxu0 0.0
      %2060 = vmatprep.subr.mxu0 0.0
      %2061 = vmatpush1.msra.mxu0 0.0
      %2062 = vmatprep.subr.mxu0 0.0
      %2063 = vmatpush1.msra.mxu0 0.0
      %2064 = vmatprep.subr.mxu0 0.0
      %2065 = vmatpush1.msra.mxu0 0.0
      %2066 = vmatprep.subr.mxu0 0.0
      %2067 = vmatpush1.msra.mxu0 0.0
      %2068 = vmatprep.subr.mxu0 0.0
      %2069 = vmatpush1.msra.mxu0 0.0
      %2070 = vmatprep.subr.mxu0 0.0
      %2071 = vmatpush1.msra.mxu0 0.0
      %2072 = vmatprep.subr.mxu0 0.0
      %2073 = vmatpush1.msra.mxu0 0.0
      %2074 = vmatprep.subr.mxu0 0.0
      %2075 = vmatpush1.msra.mxu0 0.0
      %2076 = vmatprep.subr.mxu0 %v2041
      %2077 = vmatpush1.msra.mxu0 %v2040
      %2078 = vmatprep.subr.mxu0 0.0
      %2079 = vmatpush2.msra.mxu0 0.0
      %2080 = vmatprep.subr.mxu0 0.0
      %2081 = vmatpush2.msra.mxu0 0.0
      %2082 = vmatprep.subr.mxu0 0.0
      %2083 = vmatpush2.msra.mxu0 0.0
      %2084 = vmatprep.subr.mxu0 0.0
      %2085 = vmatpush2.msra.mxu0 0.0
      %2086 = vmatprep.subr.mxu0 0.0
      %2087 = vmatpush2.msra.mxu0 0.0
      %2088 = vmatprep.subr.mxu0 0.0
      %2089 = vmatpush2.msra.mxu0 0.0
      %2090 = vmatprep.subr.mxu0 0.0
      %2091 = vmatpush2.msra.mxu0 0.0
      %2092 = vmatprep.subr.mxu0 0.0
      %2093 = vmatpush2.msra.mxu0 0.0
      %2094 = vmatprep.subr.mxu0 0.0
      %2095 = vmatpush2.msra.mxu0 0.0
      %2096 = vmatprep.subr.mxu0 0.0
      %2097 = vmatpush2.msra.mxu0 0.0
      %2098 = vmatprep.subr.mxu0 0.0
      %2099 = vmatpush2.msra.mxu0 0.0
      %2100 = vmatprep.subr.mxu0 0.0
      %2101 = vmatpush2.msra.mxu0 0.0
      %2102 = vmatprep.subr.mxu0 0.0
      %2103 = vmatpush2.msra.mxu0 0.0
      %2104 = vmatprep.subr.mxu0 0.0
      %2105 = vmatpush2.msra.mxu0 0.0
      %2106 = vmatprep.subr.mxu0 0.0
      %2107 = vmatpush2.msra.mxu0 0.0
      %2108 = vmatprep.subr.mxu0 0.0
      %2109 = vmatpush2.msra.mxu0 0.0
      %2110 = vmatprep.mubr.f32.mxu0 0.0
      %2111 = vmatmul.mubr.f32.gmra.mxu0 %v2044
      %v2112 = vpop.f32.mrf.mxu0
      %v2113 = vadd.f32 0.0, %v2112
      %v2114 = vpop.f32.mrf.mxu0
      %v2115 = vadd.f32 0.0, %v2114
      %2116 = vdwg.mxu0
      %v2117 = vadd.f32 %v2032, %v2113
      %v2118 = vadd.f32 %v2033, %v2115
      %v2119 = vmul.f32 %v2117, %v433
      %v2120 = vmul.f32 %v2118, %v433
      %2121 = vset.pattern.permute.xlu0 13
      %2122 = vperm.xlu0 %2121, %v302
      %v2123 = vpop.permute.xlu0 %2122
      %v2125 = vadd.f32 %v2119, %v2123
      %v2126 = vadd.f32 %v2120, %v2123
      %vm2127 = vcmp.ge.f32.partialorder %v2125, 0.0
      %vm2128 = vcmp.ge.f32.partialorder %v2126, 0.0
      %v2129 = vmul.f32 %v2125, 0.2
      %v2130 = vmul.f32 %v2126, 0.2
      %v2131 = vsel %vm2127, %v2125, %v2129
      %v2132 = vsel %vm2128, %v2126, %v2130
      %v2133 = vmul.f32 %v2131, 1.4142135
      %v2134 = vmul.f32 %v2132, 1.4142135
      %2135 = vst [vmem:[%s292] sm:$0xff] %v2133
      %2136 = vst [vmem:[%s292 + $0x8] sm:$0xff] %v2134
      %p2137 = scmp.lt.s32.totalorder %s18, 1
      %s2138 = scalar_select %p2137, %s18, 1
      %s2139 = smul.addr %s2138, 2
      %s2140 = smul.addr %s2139, 8
      %s2141 = scalar_lea.vmem %s7, %s2140
      // Predicated region
      $region49: #{styled_conv_block.1} parent=47 // pred_check
        %p2142 = pneg %p193
      $region50: #{styled_conv_block.1} parent=47 // pred_check_branch
        %2144 = sbr.rel (%p2142) target = $region52
      $region51: #{styled_conv_block.1} parent=47 // pred_region
        _
      $region52: #{styled_conv_block.1} parent=47 // pred_fallthru
        _
    $region48: #{styled_conv_block.1} parent=5 // pred_fallthru
      _
    %p2145 = scmp.le.s32.totalorder 2, %s13
    // Predicated region
    $region53: #{styled_conv_block.1} parent=5 // pred_check
      %p2146 = pneg %p2145
    $region54: #{styled_conv_block.1} parent=5 // pred_check_branch
      %2148 = sbr.rel (%p2146) target = $region56
    $region55: #{styled_conv_block.1} parent=5 // pred_region
      %s2149 = ssub.s32 %s13, 2
      // Predicated region
      $region57: #{styled_conv_block.1} parent=55 // pred_check
        %p2150 = pneg %p199
      $region58: #{styled_conv_block.1} parent=55 // pred_check_branch
        %2152 = sbr.rel (%p2150) target = $region60
      $region59: #{styled_conv_block.1} parent=55 // pred_region
        %p2153 = scmp.lt.s32.totalorder %s19, 1
        %s2154 = scalar_select %p2153, %s19, 1
        %s2155 = smul.addr %s2154, 2
        %s2156 = smul.addr %s2155, 8
        %s2157 = scalar_lea.vmem %s7, %s2156
      $region60: #{styled_conv_block.1} parent=55 // pred_fallthru
        _
    $region56: #{styled_conv_block.1} parent=5 // pred_fallthru
      _
  $region6: #{styled_conv_block.1} parent=0 // loop_footer
    %s17 = sadd.s32 1, %s13
  $region7: #{styled_conv_block.1} parent=0 // loop_footer_branch
    %12 = sbr.rel target = $region3
  $region8: #{styled_conv_block.1} parent=0 // loop_exit
    _

</llo_original>
